<compile_context>
chip_gen: v6e
topology: v6e:2x2x1
jax: 0.10.0
libtpu: 0.0.40
codegen_flags: <defaults>
</compile_context>

<pallas_src>
import jax
import jax.numpy as jnp
from jax.experimental import pallas as pl
from jax.experimental.pallas import tpu as pltpu

L = 256            # sequence length implied by Linear(65, 32): 8 timesteps * 8 ch + tk
T1, C1 = 32, 4     # Conv1d(1, 4, k=16, stride=8, pad=4) output (time, channels)
K1, S1, P1 = 16, 8, 4
T2, C2 = 8, 8      # Conv1d(4, 8, k=8, stride=4, pad=2) output (time, channels)
K2, S2, P2 = 8, 4, 2
EPS = 1e-5


def cnn_regression_kernel(x_ref, tk_ref, m1_ref, m2_ref, w1r_ref, wl2_ref, slab_ref,
                          out_ref):
    mx = m1_ref.dtype                      # MXU operand dtype (f32 or bf16)

    # --- unpack the small-parameter slab (static, lane-0-aligned slices) ---
    bias1 = slab_ref[0:1, :]               # (1,128)  conv1+BN1 bias, time-major
    bias2 = slab_ref[1:2, 0:64]            # (1, 64)  conv2+BN2 bias
    b1f = slab_ref[2:3, 0:32]              # (1, 32)  lin1 bias with BN3 folded
    w1tkf = slab_ref[3:4, 0:32]            # (1, 32)  lin1 column for tk (BN3 folded)
    bl2f = slab_ref[4:5, 0:8]              # (1,  8)  lin2 bias with BN4 folded
    wp = slab_ref[5:6, 0:8]                # (1,  8)  predict weight row
    wd0 = slab_ref[6:7, 0:1]               # (1,1) dense w[0]
    wd1 = slab_ref[6:7, 1:2]               # (1,1) dense w[1]
    bd = slab_ref[6:7, 2:3]                # (1,1) dense bias
    bp = slab_ref[6:7, 3:4]                # (1,1) predict bias

    # ---- dense: nn.Linear(2, 1) over the channel dim + ReLU -> (tm, 256), VPU only ----
    d = jnp.maximum(x_ref[0] * wd0 + x_ref[1] * wd1 + bd, 0.0)

    # ---- conv1 + BN1 + ReLU as ONE matmul (im2col + zero-padding absorbed into m1) ----
    h1 = jnp.maximum(
        jnp.dot(d.astype(mx), m1_ref[...], preferred_element_type=jnp.float32) + bias1,
        0.0)                                                             # (tm, 128)

    # ---- conv2 + BN2 + ReLU as ONE matmul (taps + time-padding absorbed into m2) ----
    h2 = jnp.maximum(
        jnp.dot(h1.astype(mx), m2_ref[...], preferred_element_type=jnp.float32) + bias2,
        0.0)                                                             # (tm, 64)

    # ---- flatten(channel-major, folded into w1r) + cat(tk) + Linear(65,32)+BN3+ReLU ----
    h3 = jnp.maximum(
        jnp.dot(h2.astype(mx), w1r_ref[...], preferred_element_type=jnp.float32)
        + tk_ref[...] * w1tkf + b1f, 0.0)                                # (tm, 32)

    # ---- Linear(32, 8) + BN4 + (Dropout = id) + ReLU ----
    h4 = jnp.maximum(
        jnp.dot(h3.astype(mx), wl2_ref[...], preferred_element_type=jnp.float32) + bl2f,
        0.0)                                                             # (tm, 8)

    # ---- predict: Linear(8, 1) on the VPU (row reduction; frees the MXU) ----
    out_ref[...] = jnp.sum(h4 * wp, axis=-1, keepdims=True) + bp         # (tm, 1)


def cnn_regression_forward(x, tk, p, *, tm=128):
    """x: (B, L, 2), tk: (B,).  tm=128 fills v5e's MXU; 256 recommended on v6e/v7x."""
    B = x.shape[0]
    xt = jnp.moveaxis(x.astype(jnp.float32), 2, 0)        # (2, B, L): one lane-dense slab
    tk2 = tk.reshape(-1, 1).astype(jnp.float32)           # (B, 1)

    g = (B + tm - 1) // tm
    Bp = g * tm
    if Bp != B:                                            # pad batch to a full tile
        xt = jnp.pad(xt, ((0, 0), (0, Bp - B), (0, 0)))
        tk2 = jnp.pad(tk2, ((0, Bp - B), (0, 0)))

    out = pl.pallas_call(
        cnn_regression_kernel,
        out_shape=jax.ShapeDtypeStruct((Bp, 1), jnp.float32),
        grid_spec=pltpu.PrefetchScalarGridSpec(
            num_scalar_prefetch=0,
            grid=(g,),
            in_specs=[
                pl.BlockSpec((2, tm, L), lambda i: (0, i, 0)),          # x (streams)
                pl.BlockSpec((tm, 1), lambda i: (i, 0)),                # tk (streams)
                pl.BlockSpec(p["m1"].shape, lambda i: (0, 0)),          # weights: resident
                pl.BlockSpec(p["m2"].shape, lambda i: (0, 0)),
                pl.BlockSpec(p["w1r"].shape, lambda i: (0, 0)),
                pl.BlockSpec(p["wl2"].shape, lambda i: (0, 0)),
                pl.BlockSpec((8, 128), lambda i: (0, 0)),               # packed small params
            ],
            out_specs=pl.BlockSpec((tm, 1), lambda i: (i, 0)),
        ),
        compiler_params=pltpu.CompilerParams(dimension_semantics=("parallel",)),
    )(xt, tk2, p["m1"], p["m2"], p["w1r"], p["wl2"], p["slab"])
    return out[:B, 0]                                      # matches x.reshape(-1) in PyTorch


def init_params(key):
    """Raw parameters with the exact shapes of CNNRegression.__init__ (deterministic)."""
    ks = jax.random.split(key, 16)

    def nrm(k, shape, s):
        return (s * jax.random.normal(k, shape)).astype(jnp.float32)

    def bn(k, c):
        k1, k2, k3, k4 = jax.random.split(k, 4)
        return (jax.random.uniform(k1, (c,), jnp.float32, 0.5, 1.5),   # gamma
                nrm(k2, (c,), 0.1),                                    # beta
                nrm(k3, (c,), 0.1),                                    # running_mean
                jax.random.uniform(k4, (c,), jnp.float32, 0.5, 1.5))   # running_var

    raw = {
        "dense_w": nrm(ks[0], (1, 2), 0.5),   "dense_b": nrm(ks[1], (1,), 0.5),
        "conv1_w": nrm(ks[2], (4, 1, 16), 0.25), "conv1_b": nrm(ks[3], (4,), 0.25),
        "conv2_w": nrm(ks[4], (8, 4, 8), 0.2),   "conv2_b": nrm(ks[5], (8,), 0.2),
        "lin1_w":  nrm(ks[6], (32, 65), 0.12),   "lin1_b":  nrm(ks[7], (32,), 0.12),
        "lin2_w":  nrm(ks[8], (8, 32), 0.18),    "lin2_b":  nrm(ks[9], (8,), 0.18),
        "pred_w":  nrm(ks[10], (1, 8), 0.35),    "pred_b":  nrm(ks[11], (1,), 0.35),
    }
    for name, k, c in (("bn1", ks[12], 4), ("bn2", ks[13], 8),
                       ("bn3", ks[14], 32), ("bn4", ks[15], 8)):
        g, b, m, v = bn(k, c)
        raw[name + "_g"], raw[name + "_b"], raw[name + "_m"], raw[name + "_v"] = g, b, m, v
    return raw


def fold_params(raw, mxu_dtype=jnp.float32):
    """PyTorch-shaped params -> kernel-ready tensors.

    Eval-mode BN1/BN2 folded into the conv-derived matmul weights; BN3/BN4 folded into
    the Linear weights/biases; all small vectors/scalars packed into one (8,128) slab.
    mxu_dtype=jnp.bfloat16 halves weight bytes and uses the fast MXU path on v6e/v7x.
    """
    p = {}

    # conv1 + bn1 -> m1: (L, T1*C1) with m1[i, t*C1+c] = w1[c, i-(t*S1-P1)] * s1[c]
    s1 = raw["bn1_g"] / jnp.sqrt(raw["bn1_v"] + EPS)
    w1 = raw["conv1_w"].reshape(C1, K1)
    col1 = jnp.arange(T1 * C1)
    t1, c1 = col1 // C1, col1 % C1
    i1 = jnp.arange(L)[:, None]
    j1 = i1 - (t1[None, :] * S1 - P1)
    valid1 = (j1 >= 0) & (j1 < K1)
    c1b = jnp.broadcast_to(c1[None, :], (L, T1 * C1))
    m1 = jnp.where(valid1, w1[c1b, jnp.clip(j1, 0, K1 - 1)], 0.0) * s1[c1][None, :]
    bias1 = jnp.tile((raw["conv1_b"] - raw["bn1_m"]) * s1 + raw["bn1_b"], T1)        # (128,)

    # conv2 + bn2 -> m2: (T1*C1, T2*C2), m2[t*C1+ci, u*C2+co] = w2[co,ci,t-(u*S2-P2)]*s2[co]
    s2 = raw["bn2_g"] / jnp.sqrt(raw["bn2_v"] + EPS)
    w2 = raw["conv2_w"]
    row2 = jnp.arange(T1 * C1)
    tr2, ci2 = row2 // C1, row2 % C1
    col2 = jnp.arange(T2 * C2)
    u2, co2 = col2 // C2, col2 % C2
    j2 = tr2[:, None] - (u2[None, :] * S2 - P2)
    valid2 = (j2 >= 0) & (j2 < K2)
    cob = jnp.broadcast_to(co2[None, :], (T1 * C1, T2 * C2))
    cib = jnp.broadcast_to(ci2[:, None], (T1 * C1, T2 * C2))
    m2 = jnp.where(valid2, w2[cob, cib, jnp.clip(j2, 0, K2 - 1)], 0.0) * s2[co2][None, :]
    bias2 = jnp.tile((raw["conv2_b"] - raw["bn2_m"]) * s2 + raw["bn2_b"], T2)         # (64,)

    # linear1 + BN3 fold; channel-major flatten absorbed into the row order of w1r
    s3 = raw["bn3_g"] / jnp.sqrt(raw["bn3_v"] + EPS)
    W1 = raw["lin1_w"]                                                                # (32, 65)
    w1r = jnp.transpose(W1[:, :T2 * C2].reshape(32, C2, T2), (2, 1, 0)).reshape(T2 * C2, 32)
    w1r = w1r * s3[None, :]
    w1tk = (W1[:, T2 * C2:].T * s3[None, :]).reshape(32)                              # (32,)
    b1f = raw["lin1_b"] * s3 + raw["bn3_b"] - raw["bn3_m"] * s3                       # (32,)

    # linear2 + BN4 fold
    s4 = raw["bn4_g"] / jnp.sqrt(raw["bn4_v"] + EPS)
    wl2 = raw["lin2_w"].T * s4[None, :]                                               # (32, 8)
    bl2f = raw["lin2_b"] * s4 + raw["bn4_b"] - raw["bn4_m"] * s4                      # (8,)

    p["m1"] = m1.astype(mxu_dtype)
    p["m2"] = m2.astype(mxu_dtype)
    p["w1r"] = w1r.astype(mxu_dtype)
    p["wl2"] = wl2.astype(mxu_dtype)

    # packed small-parameter slab (one (8,128) f32 VMEM tile, one DMA)
    slab = jnp.zeros((8, 128), jnp.float32)
    slab = slab.at[0, :].set(bias1)
    slab = slab.at[1, :64].set(bias2)
    slab = slab.at[2, :32].set(b1f)
    slab = slab.at[3, :32].set(w1tk)
    slab = slab.at[4, :8].set(bl2f)
    slab = slab.at[5, :8].set(raw["pred_w"][0])
    slab = slab.at[6, 0].set(raw["dense_w"][0, 0])
    slab = slab.at[6, 1].set(raw["dense_w"][0, 1])
    slab = slab.at[6, 2].set(raw["dense_b"][0])
    slab = slab.at[6, 3].set(raw["pred_b"][0])
    p["slab"] = slab
    return p


def reference_forward(x, tk, raw):
    """Pure-JAX eval-mode reference matching the PyTorch module (correctness check only)."""
    hp = jax.lax.Precision.HIGHEST
    B = x.shape[0]

    def bn(h, g, b, m, v, axis):
        shape = [1] * h.ndim
        shape[axis] = -1
        return ((h - m.reshape(shape)) / jnp.sqrt(v.reshape(shape) + EPS)
                * g.reshape(shape) + b.reshape(shape))

    d = jnp.einsum("blc,oc->blo", x, raw["dense_w"], precision=hp) + raw["dense_b"]
    d = jnp.maximum(d, 0.0)[:, :, 0]
    dpad = jnp.pad(d, ((0, 0), (P1, P1)))
    w1 = raw["conv1_w"].reshape(C1, K1)
    h1 = jnp.stack([jnp.dot(dpad[:, t * S1:t * S1 + K1], w1.T, precision=hp)
                    for t in range(T1)], axis=-1) + raw["conv1_b"][None, :, None]
    h1 = jnp.maximum(bn(h1, raw["bn1_g"], raw["bn1_b"], raw["bn1_m"], raw["bn1_v"], 1), 0.0)
    h1p = jnp.pad(h1, ((0, 0), (0, 0), (P2, P2)))
    h2 = jnp.stack([jnp.einsum("bij,oij->bo", h1p[:, :, u * S2:u * S2 + K2],
                               raw["conv2_w"], precision=hp)
                    for u in range(T2)], axis=-1) + raw["conv2_b"][None, :, None]
    h2 = jnp.maximum(bn(h2, raw["bn2_g"], raw["bn2_b"], raw["bn2_m"], raw["bn2_v"], 1), 0.0)
    flat = jnp.concatenate([h2.reshape(B, -1), tk.reshape(-1, 1)], axis=1)
    l1 = jnp.dot(flat, raw["lin1_w"].T, precision=hp) + raw["lin1_b"]
    l1 = jnp.maximum(bn(l1, raw["bn3_g"], raw["bn3_b"], raw["bn3_m"], raw["bn3_v"], 1), 0.0)
    l2 = jnp.dot(l1, raw["lin2_w"].T, precision=hp) + raw["lin2_b"]
    l2 = jnp.maximum(bn(l2, raw["bn4_g"], raw["bn4_b"], raw["bn4_m"], raw["bn4_v"], 1), 0.0)
    return (jnp.dot(l2, raw["pred_w"].T, precision=hp) + raw["pred_b"]).reshape(-1)


if __name__ == "__main__":
    key = jax.random.PRNGKey(0)
    kx, kt, kp = jax.random.split(key, 3)
    raw = init_params(kp)
    params = fold_params(raw)                      # f32 MXU operands (exact path)

    # --- small-shape check (B=2, single grid step) ---
    x = jax.random.normal(kx, (2, L, 2), jnp.float32)
    tk = jax.random.normal(kt, (2,), jnp.float32)
    y = jax.block_until_ready(cnn_regression_forward(x, tk, params))
    assert y.shape == (2,), y.shape
    assert bool(jnp.all(jnp.isfinite(y)))
    y_ref = reference_forward(x, tk, raw)
    assert bool(jnp.allclose(y, y_ref, rtol=1e-2, atol=1e-2)), (y, y_ref)

    # --- batched, multi-tile check (B=300 -> grid=(3,) at tm=128, padded to 384) ---
    kx2, kt2 = jax.random.split(kx)
    xb = jax.random.normal(kx2, (300, L, 2), jnp.float32)
    tkb = jax.random.normal(kt2, (300,), jnp.float32)
    yb = jax.block_until_ready(cnn_regression_forward(xb, tkb, params))
    yb_ref = reference_forward(xb, tkb, raw)
    assert yb.shape == (300,)
    assert bool(jnp.allclose(yb, yb_ref, rtol=1e-2, atol=1e-2))

    # --- bf16 MXU-operand variant (recommended on v6e/v7x), loose sanity tolerance ---
    params_bf16 = fold_params(raw, mxu_dtype=jnp.bfloat16)
    yb16 = jax.block_until_ready(cnn_regression_forward(xb, tkb, params_bf16))
    assert bool(jnp.all(jnp.isfinite(yb16)))
    assert bool(jnp.allclose(yb16, yb_ref, rtol=1e-1, atol=1e-1))

    print("KERNEL_OK")
</pallas_src>

<mosaic_0001>
module attributes {stable_mosaic.version = 11 : i64} {
  func.func @cnn_regression_kernel(%arg0: i32, %arg1: memref<2x128x256xf32, #tpu.memory_space<vmem>>, %arg2: memref<128x1xf32, #tpu.memory_space<vmem>>, %arg3: memref<256x128xf32, #tpu.memory_space<vmem>>, %arg4: memref<128x64xf32, #tpu.memory_space<vmem>>, %arg5: memref<64x32xf32, #tpu.memory_space<vmem>>, %arg6: memref<32x8xf32, #tpu.memory_space<vmem>>, %arg7: memref<8x128xf32, #tpu.memory_space<vmem>>, %arg8: memref<128x1xf32, #tpu.memory_space<vmem>>) attributes {dimension_semantics = [#tpu.dimension_semantics<parallel>], iteration_bounds = array<i64: 1>, scalar_prefetch = 0 : i64, scratch_operands = 0 : i64, tpu.core_type = #tpu.core_type<tc>, window_params = [{transform_indices = @transform_0, window_bounds = array<i64: 2, 128, 256>}, {transform_indices = @transform_1, window_bounds = array<i64: 128, 1>}, {pipeline_mode = #tpu.pipeline_mode<synchronous>, transform_indices = @transform_2, window_bounds = array<i64: 256, 128>}, {pipeline_mode = #tpu.pipeline_mode<synchronous>, transform_indices = @transform_3, window_bounds = array<i64: 128, 64>}, {pipeline_mode = #tpu.pipeline_mode<synchronous>, transform_indices = @transform_4, window_bounds = array<i64: 64, 32>}, {pipeline_mode = #tpu.pipeline_mode<synchronous>, transform_indices = @transform_5, window_bounds = array<i64: 32, 8>}, {pipeline_mode = #tpu.pipeline_mode<synchronous>, transform_indices = @transform_6, window_bounds = array<i64: 8, 128>}, {transform_indices = @transform_7, window_bounds = array<i64: 128, 1>}]} {
    %c0 = arith.constant 0 : index
    %c0_0 = arith.constant 0 : index
    %0 = vector.load %arg7[%c0, %c0_0] : memref<8x128xf32, #tpu.memory_space<vmem>>, vector<1x128xf32>
    %c1 = arith.constant 1 : index
    %c0_1 = arith.constant 0 : index
    %1 = vector.load %arg7[%c1, %c0_1] : memref<8x128xf32, #tpu.memory_space<vmem>>, vector<1x64xf32>
    %c2 = arith.constant 2 : index
    %c0_2 = arith.constant 0 : index
    %2 = vector.load %arg7[%c2, %c0_2] : memref<8x128xf32, #tpu.memory_space<vmem>>, vector<1x32xf32>
    %c3 = arith.constant 3 : index
    %c0_3 = arith.constant 0 : index
    %3 = vector.load %arg7[%c3, %c0_3] : memref<8x128xf32, #tpu.memory_space<vmem>>, vector<1x32xf32>
    %c4 = arith.constant 4 : index
    %c0_4 = arith.constant 0 : index
    %4 = vector.load %arg7[%c4, %c0_4] : memref<8x128xf32, #tpu.memory_space<vmem>>, vector<1x8xf32>
    %c5 = arith.constant 5 : index
    %c0_5 = arith.constant 0 : index
    %5 = vector.load %arg7[%c5, %c0_5] : memref<8x128xf32, #tpu.memory_space<vmem>>, vector<1x8xf32>
    %c6 = arith.constant 6 : index
    %c0_6 = arith.constant 0 : index
    %6 = vector.load %arg7[%c6, %c0_6] : memref<8x128xf32, #tpu.memory_space<vmem>>, vector<1x1xf32>
    %c6_7 = arith.constant 6 : index
    %c1_8 = arith.constant 1 : index
    %7 = vector.load %arg7[%c6_7, %c1_8] : memref<8x128xf32, #tpu.memory_space<vmem>>, vector<1x1xf32>
    %c6_9 = arith.constant 6 : index
    %c2_10 = arith.constant 2 : index
    %8 = vector.load %arg7[%c6_9, %c2_10] : memref<8x128xf32, #tpu.memory_space<vmem>>, vector<1x1xf32>
    %c6_11 = arith.constant 6 : index
    %c3_12 = arith.constant 3 : index
    %9 = vector.load %arg7[%c6_11, %c3_12] : memref<8x128xf32, #tpu.memory_space<vmem>>, vector<1x1xf32>
    %c0_13 = arith.constant 0 : index
    %c0_14 = arith.constant 0 : index
    %c0_15 = arith.constant 0 : index
    %10 = vector.load %arg1[%c0_13, %c0_14, %c0_15] : memref<2x128x256xf32, #tpu.memory_space<vmem>>, vector<1x128x256xf32>
    %11 = vector.shape_cast %10 : vector<1x128x256xf32> to vector<128x256xf32>
    %12 = vector.broadcast %6 : vector<1x1xf32> to vector<128x256xf32>
    %13 = arith.mulf %11, %12 : vector<128x256xf32>
    %c1_16 = arith.constant 1 : index
    %c0_17 = arith.constant 0 : index
    %c0_18 = arith.constant 0 : index
    %14 = vector.load %arg1[%c1_16, %c0_17, %c0_18] : memref<2x128x256xf32, #tpu.memory_space<vmem>>, vector<1x128x256xf32>
    %15 = vector.shape_cast %14 : vector<1x128x256xf32> to vector<128x256xf32>
    %16 = vector.broadcast %7 : vector<1x1xf32> to vector<128x256xf32>
    %17 = arith.mulf %15, %16 : vector<128x256xf32>
    %18 = arith.addf %13, %17 : vector<128x256xf32>
    %19 = vector.broadcast %8 : vector<1x1xf32> to vector<128x256xf32>
    %20 = arith.addf %18, %19 : vector<128x256xf32>
    %cst = arith.constant 0.000000e+00 : f32
    %21 = vector.broadcast %cst : f32 to vector<128x256xf32>
    %22 = arith.maximumf %20, %21 : vector<128x256xf32>
    %c0_19 = arith.constant 0 : index
    %c0_20 = arith.constant 0 : index
    %23 = vector.load %arg3[%c0_19, %c0_20] : memref<256x128xf32, #tpu.memory_space<vmem>>, vector<256x128xf32>
    %cst_21 = arith.constant dense<0.000000e+00> : vector<128x128xf32>
    %24 = tpu.matmul %22, %23, %cst_21 {dimension_numbers = #tpu.dot_dimension_numbers<[1], [0], [0], [1], [0, 0, 1, 1], [], []>} : vector<128x256xf32>, vector<256x128xf32>, vector<128x128xf32> -> vector<128x128xf32>
    %25 = vector.broadcast %0 : vector<1x128xf32> to vector<128x128xf32>
    %26 = arith.addf %24, %25 : vector<128x128xf32>
    %cst_22 = arith.constant 0.000000e+00 : f32
    %27 = vector.broadcast %cst_22 : f32 to vector<128x128xf32>
    %28 = arith.maximumf %26, %27 : vector<128x128xf32>
    %c0_23 = arith.constant 0 : index
    %c0_24 = arith.constant 0 : index
    %29 = vector.load %arg4[%c0_23, %c0_24] : memref<128x64xf32, #tpu.memory_space<vmem>>, vector<128x64xf32>
    %cst_25 = arith.constant dense<0.000000e+00> : vector<128x64xf32>
    %30 = tpu.matmul %28, %29, %cst_25 {dimension_numbers = #tpu.dot_dimension_numbers<[1], [0], [0], [1], [0, 0, 1, 1], [], []>} : vector<128x128xf32>, vector<128x64xf32>, vector<128x64xf32> -> vector<128x64xf32>
    %31 = vector.broadcast %1 : vector<1x64xf32> to vector<128x64xf32>
    %32 = arith.addf %30, %31 : vector<128x64xf32>
    %cst_26 = arith.constant 0.000000e+00 : f32
    %33 = vector.broadcast %cst_26 : f32 to vector<128x64xf32>
    %34 = arith.maximumf %32, %33 : vector<128x64xf32>
    %c0_27 = arith.constant 0 : index
    %c0_28 = arith.constant 0 : index
    %35 = vector.load %arg5[%c0_27, %c0_28] : memref<64x32xf32, #tpu.memory_space<vmem>>, vector<64x32xf32>
    %cst_29 = arith.constant dense<0.000000e+00> : vector<128x32xf32>
    %36 = tpu.matmul %34, %35, %cst_29 {dimension_numbers = #tpu.dot_dimension_numbers<[1], [0], [0], [1], [0, 0, 1, 1], [], []>} : vector<128x64xf32>, vector<64x32xf32>, vector<128x32xf32> -> vector<128x32xf32>
    %c0_30 = arith.constant 0 : index
    %c0_31 = arith.constant 0 : index
    %37 = vector.load %arg2[%c0_30, %c0_31] : memref<128x1xf32, #tpu.memory_space<vmem>>, vector<128x1xf32>
    %38 = vector.broadcast %37 : vector<128x1xf32> to vector<128x32xf32>
    %39 = vector.broadcast %3 : vector<1x32xf32> to vector<128x32xf32>
    %40 = arith.mulf %38, %39 : vector<128x32xf32>
    %41 = arith.addf %36, %40 : vector<128x32xf32>
    %42 = vector.broadcast %2 : vector<1x32xf32> to vector<128x32xf32>
    %43 = arith.addf %41, %42 : vector<128x32xf32>
    %cst_32 = arith.constant 0.000000e+00 : f32
    %44 = vector.broadcast %cst_32 : f32 to vector<128x32xf32>
    %45 = arith.maximumf %43, %44 : vector<128x32xf32>
    %c0_33 = arith.constant 0 : index
    %c0_34 = arith.constant 0 : index
    %46 = vector.load %arg6[%c0_33, %c0_34] : memref<32x8xf32, #tpu.memory_space<vmem>>, vector<32x8xf32>
    %cst_35 = arith.constant dense<0.000000e+00> : vector<128x8xf32>
    %47 = tpu.matmul %45, %46, %cst_35 {dimension_numbers = #tpu.dot_dimension_numbers<[1], [0], [0], [1], [0, 0, 1, 1], [], []>} : vector<128x32xf32>, vector<32x8xf32>, vector<128x8xf32> -> vector<128x8xf32>
    %48 = vector.broadcast %4 : vector<1x8xf32> to vector<128x8xf32>
    %49 = arith.addf %47, %48 : vector<128x8xf32>
    %cst_36 = arith.constant 0.000000e+00 : f32
    %50 = vector.broadcast %cst_36 : f32 to vector<128x8xf32>
    %51 = arith.maximumf %49, %50 : vector<128x8xf32>
    %52 = vector.broadcast %5 : vector<1x8xf32> to vector<128x8xf32>
    %53 = arith.mulf %51, %52 : vector<128x8xf32>
    %cst_37 = arith.constant dense<0.000000e+00> : vector<128xf32>
    %54 = vector.multi_reduction <add>, %53, %cst_37 [1] : vector<128x8xf32> to vector<128xf32>
    %55 = vector.shape_cast %54 : vector<128xf32> to vector<128x1xf32>
    %56 = vector.broadcast %9 : vector<1x1xf32> to vector<128x1xf32>
    %57 = arith.addf %55, %56 : vector<128x1xf32>
    %c0_38 = arith.constant 0 : index
    %c0_39 = arith.constant 0 : index
    %58 = vector.load %arg8[%c0_38, %c0_39] : memref<128x1xf32, #tpu.memory_space<vmem>>, vector<128x1xf32>
    tpu.vector_store %arg8[%c0_38, %c0_39], %57 {strides = array<i32>} : memref<128x1xf32, #tpu.memory_space<vmem>>, vector<128x1xf32>,
    return
  }
  func.func @transform_0(%arg0: i32) -> (i32, i32, i32) {
    %c0_i32 = arith.constant 0 : i32
    %c0_i32_0 = arith.constant 0 : i32
    %c0_i32_1 = arith.constant 0 : i32
    return %c0_i32, %arg0, %c0_i32_0 : i32, i32, i32
  }
  func.func @transform_1(%arg0: i32) -> (i32, i32) {
    %c0_i32 = arith.constant 0 : i32
    %c0_i32_0 = arith.constant 0 : i32
    return %arg0, %c0_i32 : i32, i32
  }
  func.func @transform_2(%arg0: i32) -> (i32, i32) {
    %c0_i32 = arith.constant 0 : i32
    %c0_i32_0 = arith.constant 0 : i32
    %c0_i32_1 = arith.constant 0 : i32
    return %c0_i32, %c0_i32_0 : i32, i32
  }
  func.func @transform_3(%arg0: i32) -> (i32, i32) {
    %c0_i32 = arith.constant 0 : i32
    %c0_i32_0 = arith.constant 0 : i32
    %c0_i32_1 = arith.constant 0 : i32
    return %c0_i32, %c0_i32_0 : i32, i32
  }
  func.func @transform_4(%arg0: i32) -> (i32, i32) {
    %c0_i32 = arith.constant 0 : i32
    %c0_i32_0 = arith.constant 0 : i32
    %c0_i32_1 = arith.constant 0 : i32
    return %c0_i32, %c0_i32_0 : i32, i32
  }
  func.func @transform_5(%arg0: i32) -> (i32, i32) {
    %c0_i32 = arith.constant 0 : i32
    %c0_i32_0 = arith.constant 0 : i32
    %c0_i32_1 = arith.constant 0 : i32
    return %c0_i32, %c0_i32_0 : i32, i32
  }
  func.func @transform_6(%arg0: i32) -> (i32, i32) {
    %c0_i32 = arith.constant 0 : i32
    %c0_i32_0 = arith.constant 0 : i32
    %c0_i32_1 = arith.constant 0 : i32
    return %c0_i32, %c0_i32_0 : i32, i32
  }
  func.func @transform_7(%arg0: i32) -> (i32, i32) {
    %c0_i32 = arith.constant 0 : i32
    %c0_i32_0 = arith.constant 0 : i32
    return %arg0, %c0_i32 : i32, i32
  }
}

</mosaic_0001>

<llo_original>
// kernel: tpu_custom_call.1
$region0: #{tpu_custom_call.1}
  #allocation0 [shape = 'u32[]', space=smem, size = 0x4, offset = 0x4, fixed_abs, tag = 'smem constant byte address 0x4 - core index']
  #allocation1 [shape = 'u32[144,128]{1,0:T(1,128)}', space=vmem, size = 0x12000, scoped, tag = 'internal scratch']
  %s0 = inlined_call_operand.hbm [shape: f32[2,128,256], index: 0, kind: input, shape index: {}]
  %s1 = inlined_call_operand.vmem [shape: f32[128,1], index: 1, kind: input, shape index: {}]
  %s2 = inlined_call_operand.vmem [shape: f32[256,128], index: 2, kind: input, shape index: {}]
  %s3 = inlined_call_operand.vmem [shape: f32[128,64], index: 3, kind: input, shape index: {}]
  %s4 = inlined_call_operand.vmem [shape: f32[64,32], index: 4, kind: input, shape index: {}]
  %s5 = inlined_call_operand.vmem [shape: f32[32,8], index: 5, kind: input, shape index: {}]
  %s6 = inlined_call_operand.vmem [shape: f32[8,128], index: 6, kind: input, shape index: {}]
  %s7 = inlined_call_operand.vmem [shape: f32[128,1], index: 7, kind: output, shape index: {}]
  %s8 = sld [smem:[#allocation0]]
  $region42: #{tpu_custom_call.1} parent=0
    _
  %s10 = ssub.s32 1, %s8
  %s11 = scalar_select 0, %s10, %s8
  $region1: #{tpu_custom_call.1} parent=0
    #allocation2 [shape = 'u8[262144]{0}', space=vmem, size = 0x40000, scoped, tag = 'input window, operand 0, single buffered']
    #allocation3 [shape = 's32[1]{0}', space=sflag, size = 0x4, scoped, tag = 'scoped memory for tpu_custom_call.1']
    %12 = vsyncpa [#allocation3], 0
    // Predicated region
    $region2: #{tpu_custom_call.1} parent=1 // pred_check
      _
    $region3: #{tpu_custom_call.1} parent=1 // pred_check_branch
      %14 = sbr.rel (0) target = $region5
    $region4: #{tpu_custom_call.1} parent=1 // pred_region
      %s16 = ssub.s32 8192, 8192
      %17 = vsyncadd [#allocation3], %s16
      %s18 = sshll.u32 [#allocation2], 4
      %s19 = int_to_ptr.vmem [resolvable:$true] %s18
      %24 = dma.hbm_to_vmem [thread:$0]  %s0, 8192, %s19, [#allocation3], 256, 256, 16
    $region5: #{tpu_custom_call.1} parent=1 // pred_fallthru
      _
    // Predicated region
    $region6: #{tpu_custom_call.1} parent=1 // pred_check
      _
    $region7: #{tpu_custom_call.1} parent=1 // pred_check_branch
      %26 = sbr.rel (0) target = $region9
    $region8: #{tpu_custom_call.1} parent=1 // pred_region
      _
    $region9: #{tpu_custom_call.1} parent=1 // pred_fallthru
      _
    // Predicated region
    $region10: #{tpu_custom_call.1} parent=1 // pred_check
      _
    $region11: #{tpu_custom_call.1} parent=1 // pred_check_branch
      %28 = sbr.rel (0) target = $region13
    $region12: #{tpu_custom_call.1} parent=1 // pred_region
      _
    $region13: #{tpu_custom_call.1} parent=1 // pred_fallthru
      _
    // Predicated region
    $region14: #{tpu_custom_call.1} parent=1 // pred_check
      _
    $region15: #{tpu_custom_call.1} parent=1 // pred_check_branch
      %30 = sbr.rel (0) target = $region17
    $region16: #{tpu_custom_call.1} parent=1 // pred_region
      _
    $region17: #{tpu_custom_call.1} parent=1 // pred_fallthru
      _
    // Predicated region
    $region18: #{tpu_custom_call.1} parent=1 // pred_check
      _
    $region19: #{tpu_custom_call.1} parent=1 // pred_check_branch
      %32 = sbr.rel (0) target = $region21
    $region20: #{tpu_custom_call.1} parent=1 // pred_region
      _
    $region21: #{tpu_custom_call.1} parent=1 // pred_fallthru
      _
    // Predicated region
    $region22: #{tpu_custom_call.1} parent=1 // pred_check
      _
    $region23: #{tpu_custom_call.1} parent=1 // pred_check_branch
      %34 = sbr.rel (0) target = $region25
    $region24: #{tpu_custom_call.1} parent=1 // pred_region
      _
    $region25: #{tpu_custom_call.1} parent=1 // pred_fallthru
      _
    // Predicated region
    $region26: #{tpu_custom_call.1} parent=1 // pred_check
      _
    $region27: #{tpu_custom_call.1} parent=1 // pred_check_branch
      %36 = sbr.rel (0) target = $region29
    $region28: #{tpu_custom_call.1} parent=1 // pred_region
      _
    $region29: #{tpu_custom_call.1} parent=1 // pred_fallthru
      _
    // Predicated region
    $region30: #{tpu_custom_call.1} parent=1 // pred_check
      _
    $region31: #{tpu_custom_call.1} parent=1 // pred_check_branch
      %38 = sbr.rel (0) target = $region33
    $region32: #{tpu_custom_call.1} parent=1 // pred_region
      %39 = dma.done [#allocation3], 8192
    $region33: #{tpu_custom_call.1} parent=1 // pred_fallthru
      _
    %v40 = vld [vmem:[%s6] sm:$0x1]
    %v41 = vld [vmem:[%s6 + $0x1] sm:$0x1]
    %v42 = vld [vmem:[%s6 + $0x2] sm:$0x1]
    %v43 = vld [vmem:[%s6 + $0x3] sm:$0x1]
    %v44 = vld [vmem:[%s6 + $0x4] sm:$0x1]
    %v45 = vld [vmem:[%s6 + $0x5] sm:$0x1]
    %v46 = vld [vmem:[%s6 + $0x6] sm:$0x1]
    %v47 = vld [vmem:[#allocation2] sm:$0xff]
    %v48 = vld [vmem:[#allocation2 + $0x8] sm:$0xff]
    %v49 = vld [vmem:[#allocation2 + $0x10] sm:$0xff]
    %v50 = vld [vmem:[#allocation2 + $0x18] sm:$0xff]
    %v51 = vld [vmem:[#allocation2 + $0x20] sm:$0xff]
    %v52 = vld [vmem:[#allocation2 + $0x28] sm:$0xff]
    %v53 = vld [vmem:[#allocation2 + $0x30] sm:$0xff]
    %v54 = vld [vmem:[#allocation2 + $0x38] sm:$0xff]
    %v55 = vld [vmem:[#allocation2 + $0x40] sm:$0xff]
    %v56 = vld [vmem:[#allocation2 + $0x48] sm:$0xff]
    %v57 = vld [vmem:[#allocation2 + $0x50] sm:$0xff]
    %v58 = vld [vmem:[#allocation2 + $0x58] sm:$0xff]
    %v59 = vld [vmem:[#allocation2 + $0x60] sm:$0xff]
    %v60 = vld [vmem:[#allocation2 + $0x68] sm:$0xff]
    %v61 = vld [vmem:[#allocation2 + $0x70] sm:$0xff]
    %v62 = vld [vmem:[#allocation2 + $0x78] sm:$0xff]
    %v63 = vld [vmem:[#allocation2 + $0x80] sm:$0xff]
    %v64 = vld [vmem:[#allocation2 + $0x88] sm:$0xff]
    %v65 = vld [vmem:[#allocation2 + $0x90] sm:$0xff]
    %v66 = vld [vmem:[#allocation2 + $0x98] sm:$0xff]
    %v67 = vld [vmem:[#allocation2 + $0xa0] sm:$0xff]
    %v68 = vld [vmem:[#allocation2 + $0xa8] sm:$0xff]
    %v69 = vld [vmem:[#allocation2 + $0xb0] sm:$0xff]
    %v70 = vld [vmem:[#allocation2 + $0xb8] sm:$0xff]
    %v71 = vld [vmem:[#allocation2 + $0xc0] sm:$0xff]
    %v72 = vld [vmem:[#allocation2 + $0xc8] sm:$0xff]
    %v73 = vld [vmem:[#allocation2 + $0xd0] sm:$0xff]
    %v74 = vld [vmem:[#allocation2 + $0xd8] sm:$0xff]
    %v75 = vld [vmem:[#allocation2 + $0xe0] sm:$0xff]
    %v76 = vld [vmem:[#allocation2 + $0xe8] sm:$0xff]
    %v77 = vld [vmem:[#allocation2 + $0xf0] sm:$0xff]
    %v78 = vld [vmem:[#allocation2 + $0xf8] sm:$0xff]
    %s80 = vtos %v46
    %v81 = vstv %s80
    %v83 = vmul.f32 %v47, %v81
    %v84 = vmul.f32 %v48, %v81
    %v85 = vmul.f32 %v49, %v81
    %v86 = vmul.f32 %v50, %v81
    %v87 = vmul.f32 %v51, %v81
    %v88 = vmul.f32 %v52, %v81
    %v89 = vmul.f32 %v53, %v81
    %v90 = vmul.f32 %v54, %v81
    %v91 = vmul.f32 %v55, %v81
    %v92 = vmul.f32 %v56, %v81
    %v93 = vmul.f32 %v57, %v81
    %v94 = vmul.f32 %v58, %v81
    %v95 = vmul.f32 %v59, %v81
    %v96 = vmul.f32 %v60, %v81
    %v97 = vmul.f32 %v61, %v81
    %v98 = vmul.f32 %v62, %v81
    %v99 = vmul.f32 %v63, %v81
    %v100 = vmul.f32 %v64, %v81
    %v101 = vmul.f32 %v65, %v81
    %v102 = vmul.f32 %v66, %v81
    %v103 = vmul.f32 %v67, %v81
    %v104 = vmul.f32 %v68, %v81
    %v105 = vmul.f32 %v69, %v81
    %v106 = vmul.f32 %v70, %v81
    %v107 = vmul.f32 %v71, %v81
    %v108 = vmul.f32 %v72, %v81
    %v109 = vmul.f32 %v73, %v81
    %v110 = vmul.f32 %v74, %v81
    %v111 = vmul.f32 %v75, %v81
    %v112 = vmul.f32 %v76, %v81
    %v113 = vmul.f32 %v77, %v81
    %v114 = vmul.f32 %v78, %v81
    %s115 = scalar_lea.vmem [#allocation2], 256
    %v116 = vld [vmem:[%s115] sm:$0xff]
    %v117 = vld [vmem:[%s115 + $0x8] sm:$0xff]
    %v118 = vld [vmem:[%s115 + $0x10] sm:$0xff]
    %v119 = vld [vmem:[%s115 + $0x18] sm:$0xff]
    %v120 = vld [vmem:[%s115 + $0x20] sm:$0xff]
    %v121 = vld [vmem:[%s115 + $0x28] sm:$0xff]
    %v122 = vld [vmem:[%s115 + $0x30] sm:$0xff]
    %v123 = vld [vmem:[%s115 + $0x38] sm:$0xff]
    %v124 = vld [vmem:[%s115 + $0x40] sm:$0xff]
    %v125 = vld [vmem:[%s115 + $0x48] sm:$0xff]
    %v126 = vld [vmem:[%s115 + $0x50] sm:$0xff]
    %v127 = vld [vmem:[%s115 + $0x58] sm:$0xff]
    %v128 = vld [vmem:[%s115 + $0x60] sm:$0xff]
    %v129 = vld [vmem:[%s115 + $0x68] sm:$0xff]
    %v130 = vld [vmem:[%s115 + $0x70] sm:$0xff]
    %v131 = vld [vmem:[%s115 + $0x78] sm:$0xff]
    %v132 = vld [vmem:[%s115 + $0x80] sm:$0xff]
    %v133 = vld [vmem:[%s115 + $0x88] sm:$0xff]
    %v134 = vld [vmem:[%s115 + $0x90] sm:$0xff]
    %v135 = vld [vmem:[%s115 + $0x98] sm:$0xff]
    %v136 = vld [vmem:[%s115 + $0xa0] sm:$0xff]
    %v137 = vld [vmem:[%s115 + $0xa8] sm:$0xff]
    %v138 = vld [vmem:[%s115 + $0xb0] sm:$0xff]
    %v139 = vld [vmem:[%s115 + $0xb8] sm:$0xff]
    %v140 = vld [vmem:[%s115 + $0xc0] sm:$0xff]
    %v141 = vld [vmem:[%s115 + $0xc8] sm:$0xff]
    %v142 = vld [vmem:[%s115 + $0xd0] sm:$0xff]
    %v143 = vld [vmem:[%s115 + $0xd8] sm:$0xff]
    %v144 = vld [vmem:[%s115 + $0xe0] sm:$0xff]
    %v145 = vld [vmem:[%s115 + $0xe8] sm:$0xff]
    %v146 = vld [vmem:[%s115 + $0xf0] sm:$0xff]
    %v147 = vld [vmem:[%s115 + $0xf8] sm:$0xff]
    %148 = vrot.lane.b32.xlu0 %v46, 127
    %v149 = vpop.permute.xlu0 %148
    %s150 = vtos %v149
    %v151 = vstv %s150
    %v153 = vmul.f32 %v116, %v151
    %v154 = vmul.f32 %v117, %v151
    %v155 = vmul.f32 %v118, %v151
    %v156 = vmul.f32 %v119, %v151
    %v157 = vmul.f32 %v120, %v151
    %v158 = vmul.f32 %v121, %v151
    %v159 = vmul.f32 %v122, %v151
    %v160 = vmul.f32 %v123, %v151
    %v161 = vmul.f32 %v124, %v151
    %v162 = vmul.f32 %v125, %v151
    %v163 = vmul.f32 %v126, %v151
    %v164 = vmul.f32 %v127, %v151
    %v165 = vmul.f32 %v128, %v151
    %v166 = vmul.f32 %v129, %v151
    %v167 = vmul.f32 %v130, %v151
    %v168 = vmul.f32 %v131, %v151
    %v169 = vmul.f32 %v132, %v151
    %v170 = vmul.f32 %v133, %v151
    %v171 = vmul.f32 %v134, %v151
    %v172 = vmul.f32 %v135, %v151
    %v173 = vmul.f32 %v136, %v151
    %v174 = vmul.f32 %v137, %v151
    %v175 = vmul.f32 %v138, %v151
    %v176 = vmul.f32 %v139, %v151
    %v177 = vmul.f32 %v140, %v151
    %v178 = vmul.f32 %v141, %v151
    %v179 = vmul.f32 %v142, %v151
    %v180 = vmul.f32 %v143, %v151
    %v181 = vmul.f32 %v144, %v151
    %v182 = vmul.f32 %v145, %v151
    %v183 = vmul.f32 %v146, %v151
    %v184 = vmul.f32 %v147, %v151
    %v185 = vadd.f32 %v83, %v153
    %v186 = vadd.f32 %v84, %v154
    %v187 = vadd.f32 %v85, %v155
    %v188 = vadd.f32 %v86, %v156
    %v189 = vadd.f32 %v87, %v157
    %v190 = vadd.f32 %v88, %v158
    %v191 = vadd.f32 %v89, %v159
    %v192 = vadd.f32 %v90, %v160
    %v193 = vadd.f32 %v91, %v161
    %v194 = vadd.f32 %v92, %v162
    %v195 = vadd.f32 %v93, %v163
    %v196 = vadd.f32 %v94, %v164
    %v197 = vadd.f32 %v95, %v165
    %v198 = vadd.f32 %v96, %v166
    %v199 = vadd.f32 %v97, %v167
    %v200 = vadd.f32 %v98, %v168
    %v201 = vadd.f32 %v99, %v169
    %v202 = vadd.f32 %v100, %v170
    %v203 = vadd.f32 %v101, %v171
    %v204 = vadd.f32 %v102, %v172
    %v205 = vadd.f32 %v103, %v173
    %v206 = vadd.f32 %v104, %v174
    %v207 = vadd.f32 %v105, %v175
    %v208 = vadd.f32 %v106, %v176
    %v209 = vadd.f32 %v107, %v177
    %v210 = vadd.f32 %v108, %v178
    %v211 = vadd.f32 %v109, %v179
    %v212 = vadd.f32 %v110, %v180
    %v213 = vadd.f32 %v111, %v181
    %v214 = vadd.f32 %v112, %v182
    %v215 = vadd.f32 %v113, %v183
    %v216 = vadd.f32 %v114, %v184
    %217 = vrot.lane.b32.xlu0 %v46, 126
    %v218 = vpop.permute.xlu0 %217
    %s219 = vtos %v218
    %v220 = vstv %s219
    %v222 = vadd.f32 %v185, %v220
    %v223 = vadd.f32 %v186, %v220
    %v224 = vadd.f32 %v187, %v220
    %v225 = vadd.f32 %v188, %v220
    %v226 = vadd.f32 %v189, %v220
    %v227 = vadd.f32 %v190, %v220
    %v228 = vadd.f32 %v191, %v220
    %v229 = vadd.f32 %v192, %v220
    %v230 = vadd.f32 %v193, %v220
    %v231 = vadd.f32 %v194, %v220
    %v232 = vadd.f32 %v195, %v220
    %v233 = vadd.f32 %v196, %v220
    %v234 = vadd.f32 %v197, %v220
    %v235 = vadd.f32 %v198, %v220
    %v236 = vadd.f32 %v199, %v220
    %v237 = vadd.f32 %v200, %v220
    %v238 = vadd.f32 %v201, %v220
    %v239 = vadd.f32 %v202, %v220
    %v240 = vadd.f32 %v203, %v220
    %v241 = vadd.f32 %v204, %v220
    %v242 = vadd.f32 %v205, %v220
    %v243 = vadd.f32 %v206, %v220
    %v244 = vadd.f32 %v207, %v220
    %v245 = vadd.f32 %v208, %v220
    %v246 = vadd.f32 %v209, %v220
    %v247 = vadd.f32 %v210, %v220
    %v248 = vadd.f32 %v211, %v220
    %v249 = vadd.f32 %v212, %v220
    %v250 = vadd.f32 %v213, %v220
    %v251 = vadd.f32 %v214, %v220
    %v252 = vadd.f32 %v215, %v220
    %v253 = vadd.f32 %v216, %v220
    %v254 = vmax.f32 %v222, 0.0
    %v255 = vmax.f32 %v223, 0.0
    %v256 = vmax.f32 %v224, 0.0
    %v257 = vmax.f32 %v225, 0.0
    %v258 = vmax.f32 %v226, 0.0
    %v259 = vmax.f32 %v227, 0.0
    %v260 = vmax.f32 %v228, 0.0
    %v261 = vmax.f32 %v229, 0.0
    %v262 = vmax.f32 %v230, 0.0
    %v263 = vmax.f32 %v231, 0.0
    %v264 = vmax.f32 %v232, 0.0
    %v265 = vmax.f32 %v233, 0.0
    %v266 = vmax.f32 %v234, 0.0
    %v267 = vmax.f32 %v235, 0.0
    %v268 = vmax.f32 %v236, 0.0
    %v269 = vmax.f32 %v237, 0.0
    %v270 = vmax.f32 %v238, 0.0
    %v271 = vmax.f32 %v239, 0.0
    %v272 = vmax.f32 %v240, 0.0
    %v273 = vmax.f32 %v241, 0.0
    %v274 = vmax.f32 %v242, 0.0
    %v275 = vmax.f32 %v243, 0.0
    %v276 = vmax.f32 %v244, 0.0
    %v277 = vmax.f32 %v245, 0.0
    %v278 = vmax.f32 %v246, 0.0
    %v279 = vmax.f32 %v247, 0.0
    %v280 = vmax.f32 %v248, 0.0
    %v281 = vmax.f32 %v249, 0.0
    %v282 = vmax.f32 %v250, 0.0
    %v283 = vmax.f32 %v251, 0.0
    %v284 = vmax.f32 %v252, 0.0
    %v285 = vmax.f32 %v253, 0.0
    %v286 = vld [vmem:[%s2] sm:$0xff]
    %v287 = vld [vmem:[%s2 + $0x8] sm:$0xff]
    %v288 = vld [vmem:[%s2 + $0x10] sm:$0xff]
    %v289 = vld [vmem:[%s2 + $0x18] sm:$0xff]
    %v290 = vld [vmem:[%s2 + $0x20] sm:$0xff]
    %v291 = vld [vmem:[%s2 + $0x28] sm:$0xff]
    %v292 = vld [vmem:[%s2 + $0x30] sm:$0xff]
    %v293 = vld [vmem:[%s2 + $0x38] sm:$0xff]
    %v294 = vld [vmem:[%s2 + $0x40] sm:$0xff]
    %v295 = vld [vmem:[%s2 + $0x48] sm:$0xff]
    %v296 = vld [vmem:[%s2 + $0x50] sm:$0xff]
    %v297 = vld [vmem:[%s2 + $0x58] sm:$0xff]
    %v298 = vld [vmem:[%s2 + $0x60] sm:$0xff]
    %v299 = vld [vmem:[%s2 + $0x68] sm:$0xff]
    %v300 = vld [vmem:[%s2 + $0x70] sm:$0xff]
    %v301 = vld [vmem:[%s2 + $0x78] sm:$0xff]
    %v302 = vld [vmem:[%s2 + $0x80] sm:$0xff]
    %v303 = vld [vmem:[%s2 + $0x88] sm:$0xff]
    %v304 = vld [vmem:[%s2 + $0x90] sm:$0xff]
    %v305 = vld [vmem:[%s2 + $0x98] sm:$0xff]
    %v306 = vld [vmem:[%s2 + $0xa0] sm:$0xff]
    %v307 = vld [vmem:[%s2 + $0xa8] sm:$0xff]
    %v308 = vld [vmem:[%s2 + $0xb0] sm:$0xff]
    %v309 = vld [vmem:[%s2 + $0xb8] sm:$0xff]
    %v310 = vld [vmem:[%s2 + $0xc0] sm:$0xff]
    %v311 = vld [vmem:[%s2 + $0xc8] sm:$0xff]
    %v312 = vld [vmem:[%s2 + $0xd0] sm:$0xff]
    %v313 = vld [vmem:[%s2 + $0xd8] sm:$0xff]
    %v314 = vld [vmem:[%s2 + $0xe0] sm:$0xff]
    %v315 = vld [vmem:[%s2 + $0xe8] sm:$0xff]
    %v316 = vld [vmem:[%s2 + $0xf0] sm:$0xff]
    %v317 = vld [vmem:[%s2 + $0xf8] sm:$0xff]
    %v318 = vlaneseq
    %v319 = vshrl.u32 %v318, 7
    %v320 = vsub.s32 0, %v319
    %v321 = vrot.slane %v40, %v320
    %322 = vmatprep.subr.mxu0 0.0
    %323 = vmatpush1.msra.mxu0 %v301
    %324 = vmatprep.subr.mxu0 0.0
    %325 = vmatpush1.msra.mxu0 %v300
    %326 = vmatprep.subr.mxu0 0.0
    %327 = vmatpush1.msra.mxu0 %v299
    %328 = vmatprep.subr.mxu0 0.0
    %329 = vmatpush1.msra.mxu0 %v298
    %330 = vmatprep.subr.mxu0 0.0
    %331 = vmatpush1.msra.mxu0 %v297
    %332 = vmatprep.subr.mxu0 0.0
    %333 = vmatpush1.msra.mxu0 %v296
    %334 = vmatprep.subr.mxu0 0.0
    %335 = vmatpush1.msra.mxu0 %v295
    %336 = vmatprep.subr.mxu0 0.0
    %337 = vmatpush1.msra.mxu0 %v294
    %338 = vmatprep.subr.mxu0 0.0
    %339 = vmatpush1.msra.mxu0 %v293
    %340 = vmatprep.subr.mxu0 0.0
    %341 = vmatpush1.msra.mxu0 %v292
    %342 = vmatprep.subr.mxu0 0.0
    %343 = vmatpush1.msra.mxu0 %v291
    %344 = vmatprep.subr.mxu0 0.0
    %345 = vmatpush1.msra.mxu0 %v290
    %346 = vmatprep.subr.mxu0 0.0
    %347 = vmatpush1.msra.mxu0 %v289
    %348 = vmatprep.subr.mxu0 0.0
    %349 = vmatpush1.msra.mxu0 %v288
    %350 = vmatprep.subr.mxu0 0.0
    %351 = vmatpush1.msra.mxu0 %v287
    %352 = vmatprep.subr.mxu0 0.0
    %353 = vmatpush1.msra.mxu0 %v286
    %354 = vmatprep.subr.mxu0 0.0
    %355 = vmatpush2.msra.mxu0 %v317
    %356 = vmatprep.subr.mxu0 0.0
    %357 = vmatpush2.msra.mxu0 %v316
    %358 = vmatprep.subr.mxu0 0.0
    %359 = vmatpush2.msra.mxu0 %v315
    %360 = vmatprep.subr.mxu0 0.0
    %361 = vmatpush2.msra.mxu0 %v314
    %362 = vmatprep.subr.mxu0 0.0
    %363 = vmatpush2.msra.mxu0 %v313
    %364 = vmatprep.subr.mxu0 0.0
    %365 = vmatpush2.msra.mxu0 %v312
    %366 = vmatprep.subr.mxu0 0.0
    %367 = vmatpush2.msra.mxu0 %v311
    %368 = vmatprep.subr.mxu0 0.0
    %369 = vmatpush2.msra.mxu0 %v310
    %370 = vmatprep.subr.mxu0 0.0
    %371 = vmatpush2.msra.mxu0 %v309
    %372 = vmatprep.subr.mxu0 0.0
    %373 = vmatpush2.msra.mxu0 %v308
    %374 = vmatprep.subr.mxu0 0.0
    %375 = vmatpush2.msra.mxu0 %v307
    %376 = vmatprep.subr.mxu0 0.0
    %377 = vmatpush2.msra.mxu0 %v306
    %378 = vmatprep.subr.mxu0 0.0
    %379 = vmatpush2.msra.mxu0 %v305
    %380 = vmatprep.subr.mxu0 0.0
    %381 = vmatpush2.msra.mxu0 %v304
    %382 = vmatprep.subr.mxu0 0.0
    %383 = vmatpush2.msra.mxu0 %v303
    %384 = vmatprep.subr.mxu0 0.0
    %385 = vmatpush2.msra.mxu0 %v302
    %386 = vmatprep.mubr.f32.mxu0 %v255
    %387 = vmatmul.mubr.f32.gmra.mxu0 %v254
    %v388 = vpop.f32.mrf.mxu0
    %v389 = vadd.f32 %v321, %v388
    %v390 = vpop.f32.mrf.mxu0
    %391 = vmatprep.mubr.f32.mxu0 %v257
    %392 = vmatmul.mubr.f32.gmra.mxu0 %v256
    %v393 = vpop.f32.mrf.mxu0
    %v394 = vadd.f32 %v321, %v393
    %v395 = vpop.f32.mrf.mxu0
    %396 = vmatprep.mubr.f32.mxu0 %v259
    %397 = vmatmul.mubr.f32.gmra.mxu0 %v258
    %v398 = vpop.f32.mrf.mxu0
    %v399 = vadd.f32 %v321, %v398
    %v400 = vpop.f32.mrf.mxu0
    %401 = vmatprep.mubr.f32.mxu0 %v261
    %402 = vmatmul.mubr.f32.gmra.mxu0 %v260
    %v403 = vpop.f32.mrf.mxu0
    %v404 = vadd.f32 %v321, %v403
    %v405 = vpop.f32.mrf.mxu0
    %406 = vmatprep.mubr.f32.mxu0 %v263
    %407 = vmatmul.mubr.f32.gmra.mxu0 %v262
    %v408 = vpop.f32.mrf.mxu0
    %v409 = vadd.f32 %v321, %v408
    %v410 = vpop.f32.mrf.mxu0
    %411 = vmatprep.mubr.f32.mxu0 %v265
    %412 = vmatmul.mubr.f32.gmra.mxu0 %v264
    %v413 = vpop.f32.mrf.mxu0
    %v414 = vadd.f32 %v321, %v413
    %v415 = vpop.f32.mrf.mxu0
    %416 = vmatprep.mubr.f32.mxu0 %v267
    %417 = vmatmul.mubr.f32.gmra.mxu0 %v266
    %v418 = vpop.f32.mrf.mxu0
    %v419 = vadd.f32 %v321, %v418
    %v420 = vpop.f32.mrf.mxu0
    %421 = vmatprep.mubr.f32.mxu0 %v269
    %422 = vmatmul.mubr.f32.gmra.mxu0 %v268
    %v423 = vpop.f32.mrf.mxu0
    %v424 = vadd.f32 %v321, %v423
    %v425 = vpop.f32.mrf.mxu0
    %426 = vmatprep.mubr.f32.mxu0 %v271
    %427 = vmatmul.mubr.f32.gmra.mxu0 %v270
    %v428 = vpop.f32.mrf.mxu0
    %v429 = vadd.f32 %v321, %v428
    %v430 = vpop.f32.mrf.mxu0
    %431 = vmatprep.mubr.f32.mxu0 %v273
    %432 = vmatmul.mubr.f32.gmra.mxu0 %v272
    %v433 = vpop.f32.mrf.mxu0
    %v434 = vadd.f32 %v321, %v433
    %v435 = vpop.f32.mrf.mxu0
    %436 = vmatprep.mubr.f32.mxu0 %v275
    %437 = vmatmul.mubr.f32.gmra.mxu0 %v274
    %v438 = vpop.f32.mrf.mxu0
    %v439 = vadd.f32 %v321, %v438
    %v440 = vpop.f32.mrf.mxu0
    %441 = vmatprep.mubr.f32.mxu0 %v277
    %442 = vmatmul.mubr.f32.gmra.mxu0 %v276
    %v443 = vpop.f32.mrf.mxu0
    %v444 = vadd.f32 %v321, %v443
    %v445 = vpop.f32.mrf.mxu0
    %446 = vmatprep.mubr.f32.mxu0 %v279
    %447 = vmatmul.mubr.f32.gmra.mxu0 %v278
    %v448 = vpop.f32.mrf.mxu0
    %v449 = vadd.f32 %v321, %v448
    %v450 = vpop.f32.mrf.mxu0
    %451 = vmatprep.mubr.f32.mxu0 %v281
    %452 = vmatmul.mubr.f32.gmra.mxu0 %v280
    %v453 = vpop.f32.mrf.mxu0
    %v454 = vadd.f32 %v321, %v453
    %v455 = vpop.f32.mrf.mxu0
    %456 = vmatprep.mubr.f32.mxu0 %v283
    %457 = vmatmul.mubr.f32.gmra.mxu0 %v282
    %v458 = vpop.f32.mrf.mxu0
    %v459 = vadd.f32 %v321, %v458
    %v460 = vpop.f32.mrf.mxu0
    %461 = vmatprep.mubr.f32.mxu0 %v285
    %462 = vmatmul.mubr.f32.gmra.mxu0 %v284
    %v463 = vpop.f32.mrf.mxu0
    %v464 = vadd.f32 %v321, %v463
    %v465 = vpop.f32.mrf.mxu0
    %466 = vdwg.mxu0
    %v467 = vmax.f32 %v389, 0.0
    %v468 = vmax.f32 %v394, 0.0
    %v469 = vmax.f32 %v399, 0.0
    %v470 = vmax.f32 %v404, 0.0
    %v471 = vmax.f32 %v409, 0.0
    %v472 = vmax.f32 %v414, 0.0
    %v473 = vmax.f32 %v419, 0.0
    %v474 = vmax.f32 %v424, 0.0
    %v475 = vmax.f32 %v429, 0.0
    %v476 = vmax.f32 %v434, 0.0
    %v477 = vmax.f32 %v439, 0.0
    %v478 = vmax.f32 %v444, 0.0
    %v479 = vmax.f32 %v449, 0.0
    %v480 = vmax.f32 %v454, 0.0
    %v481 = vmax.f32 %v459, 0.0
    %v482 = vmax.f32 %v464, 0.0
    %v483 = vld [vmem:[%s3] sm:$0xff]
    %v484 = vld [vmem:[%s3 + $0x8] sm:$0xff]
    %v485 = vld [vmem:[%s3 + $0x10] sm:$0xff]
    %v486 = vld [vmem:[%s3 + $0x18] sm:$0xff]
    %v487 = vld [vmem:[%s3 + $0x20] sm:$0xff]
    %v488 = vld [vmem:[%s3 + $0x28] sm:$0xff]
    %v489 = vld [vmem:[%s3 + $0x30] sm:$0xff]
    %v490 = vld [vmem:[%s3 + $0x38] sm:$0xff]
    %v491 = vld [vmem:[%s3 + $0x40] sm:$0xff]
    %v492 = vld [vmem:[%s3 + $0x48] sm:$0xff]
    %v493 = vld [vmem:[%s3 + $0x50] sm:$0xff]
    %v494 = vld [vmem:[%s3 + $0x58] sm:$0xff]
    %v495 = vld [vmem:[%s3 + $0x60] sm:$0xff]
    %v496 = vld [vmem:[%s3 + $0x68] sm:$0xff]
    %v497 = vld [vmem:[%s3 + $0x70] sm:$0xff]
    %v498 = vld [vmem:[%s3 + $0x78] sm:$0xff]
    %v499 = vlaneseq
    %v500 = vshrl.u32 %v499, 7
    %v501 = vsub.s32 0, %v500
    %v502 = vrot.slane %v41, %v501
    %503 = vmatprep.subr.mxu0 0.0
    %504 = vmatpush1.msra.mxu0 %v498
    %505 = vmatprep.subr.mxu0 0.0
    %506 = vmatpush1.msra.mxu0 %v497
    %507 = vmatprep.subr.mxu0 0.0
    %508 = vmatpush1.msra.mxu0 %v496
    %509 = vmatprep.subr.mxu0 0.0
    %510 = vmatpush1.msra.mxu0 %v495
    %511 = vmatprep.subr.mxu0 0.0
    %512 = vmatpush1.msra.mxu0 %v494
    %513 = vmatprep.subr.mxu0 0.0
    %514 = vmatpush1.msra.mxu0 %v493
    %515 = vmatprep.subr.mxu0 0.0
    %516 = vmatpush1.msra.mxu0 %v492
    %517 = vmatprep.subr.mxu0 0.0
    %518 = vmatpush1.msra.mxu0 %v491
    %519 = vmatprep.subr.mxu0 0.0
    %520 = vmatpush1.msra.mxu0 %v490
    %521 = vmatprep.subr.mxu0 0.0
    %522 = vmatpush1.msra.mxu0 %v489
    %523 = vmatprep.subr.mxu0 0.0
    %524 = vmatpush1.msra.mxu0 %v488
    %525 = vmatprep.subr.mxu0 0.0
    %526 = vmatpush1.msra.mxu0 %v487
    %527 = vmatprep.subr.mxu0 0.0
    %528 = vmatpush1.msra.mxu0 %v486
    %529 = vmatprep.subr.mxu0 0.0
    %530 = vmatpush1.msra.mxu0 %v485
    %531 = vmatprep.subr.mxu0 0.0
    %532 = vmatpush1.msra.mxu0 %v484
    %533 = vmatprep.subr.mxu0 0.0
    %534 = vmatpush1.msra.mxu0 %v483
    %535 = vmatprep.subr.mxu0 0.0
    %536 = vmatpush2.msra.mxu0 0.0
    %537 = vmatprep.subr.mxu0 0.0
    %538 = vmatpush2.msra.mxu0 0.0
    %539 = vmatprep.subr.mxu0 0.0
    %540 = vmatpush2.msra.mxu0 0.0
    %541 = vmatprep.subr.mxu0 0.0
    %542 = vmatpush2.msra.mxu0 0.0
    %543 = vmatprep.subr.mxu0 0.0
    %544 = vmatpush2.msra.mxu0 0.0
    %545 = vmatprep.subr.mxu0 0.0
    %546 = vmatpush2.msra.mxu0 0.0
    %547 = vmatprep.subr.mxu0 0.0
    %548 = vmatpush2.msra.mxu0 0.0
    %549 = vmatprep.subr.mxu0 0.0
    %550 = vmatpush2.msra.mxu0 0.0
    %551 = vmatprep.subr.mxu0 0.0
    %552 = vmatpush2.msra.mxu0 0.0
    %553 = vmatprep.subr.mxu0 0.0
    %554 = vmatpush2.msra.mxu0 0.0
    %555 = vmatprep.subr.mxu0 0.0
    %556 = vmatpush2.msra.mxu0 0.0
    %557 = vmatprep.subr.mxu0 0.0
    %558 = vmatpush2.msra.mxu0 0.0
    %559 = vmatprep.subr.mxu0 0.0
    %560 = vmatpush2.msra.mxu0 0.0
    %561 = vmatprep.subr.mxu0 0.0
    %562 = vmatpush2.msra.mxu0 0.0
    %563 = vmatprep.subr.mxu0 0.0
    %564 = vmatpush2.msra.mxu0 0.0
    %565 = vmatprep.subr.mxu0 0.0
    %566 = vmatpush2.msra.mxu0 0.0
    %567 = vmatprep.mubr.f32.mxu0 0.0
    %568 = vmatmul.mubr.f32.gmra.mxu0 %v467
    %v569 = vpop.f32.mrf.mxu0
    %v570 = vadd.f32 %v502, %v569
    %v571 = vpop.f32.mrf.mxu0
    %572 = vmatprep.mubr.f32.mxu0 0.0
    %573 = vmatmul.mubr.f32.gmra.mxu0 %v468
    %v574 = vpop.f32.mrf.mxu0
    %v575 = vadd.f32 %v502, %v574
    %v576 = vpop.f32.mrf.mxu0
    %577 = vmatprep.mubr.f32.mxu0 0.0
    %578 = vmatmul.mubr.f32.gmra.mxu0 %v469
    %v579 = vpop.f32.mrf.mxu0
    %v580 = vadd.f32 %v502, %v579
    %v581 = vpop.f32.mrf.mxu0
    %582 = vmatprep.mubr.f32.mxu0 0.0
    %583 = vmatmul.mubr.f32.gmra.mxu0 %v470
    %v584 = vpop.f32.mrf.mxu0
    %v585 = vadd.f32 %v502, %v584
    %v586 = vpop.f32.mrf.mxu0
    %587 = vmatprep.mubr.f32.mxu0 0.0
    %588 = vmatmul.mubr.f32.gmra.mxu0 %v471
    %v589 = vpop.f32.mrf.mxu0
    %v590 = vadd.f32 %v502, %v589
    %v591 = vpop.f32.mrf.mxu0
    %592 = vmatprep.mubr.f32.mxu0 0.0
    %593 = vmatmul.mubr.f32.gmra.mxu0 %v472
    %v594 = vpop.f32.mrf.mxu0
    %v595 = vadd.f32 %v502, %v594
    %v596 = vpop.f32.mrf.mxu0
    %597 = vmatprep.mubr.f32.mxu0 0.0
    %598 = vmatmul.mubr.f32.gmra.mxu0 %v473
    %v599 = vpop.f32.mrf.mxu0
    %v600 = vadd.f32 %v502, %v599
    %v601 = vpop.f32.mrf.mxu0
    %602 = vmatprep.mubr.f32.mxu0 0.0
    %603 = vmatmul.mubr.f32.gmra.mxu0 %v474
    %v604 = vpop.f32.mrf.mxu0
    %v605 = vadd.f32 %v502, %v604
    %v606 = vpop.f32.mrf.mxu0
    %607 = vmatprep.mubr.f32.mxu0 0.0
    %608 = vmatmul.mubr.f32.gmra.mxu0 %v475
    %v609 = vpop.f32.mrf.mxu0
    %v610 = vadd.f32 %v502, %v609
    %v611 = vpop.f32.mrf.mxu0
    %612 = vmatprep.mubr.f32.mxu0 0.0
    %613 = vmatmul.mubr.f32.gmra.mxu0 %v476
    %v614 = vpop.f32.mrf.mxu0
    %v615 = vadd.f32 %v502, %v614
    %v616 = vpop.f32.mrf.mxu0
    %617 = vmatprep.mubr.f32.mxu0 0.0
    %618 = vmatmul.mubr.f32.gmra.mxu0 %v477
    %v619 = vpop.f32.mrf.mxu0
    %v620 = vadd.f32 %v502, %v619
    %v621 = vpop.f32.mrf.mxu0
    %622 = vmatprep.mubr.f32.mxu0 0.0
    %623 = vmatmul.mubr.f32.gmra.mxu0 %v478
    %v624 = vpop.f32.mrf.mxu0
    %v625 = vadd.f32 %v502, %v624
    %v626 = vpop.f32.mrf.mxu0
    %627 = vmatprep.mubr.f32.mxu0 0.0
    %628 = vmatmul.mubr.f32.gmra.mxu0 %v479
    %v629 = vpop.f32.mrf.mxu0
    %v630 = vadd.f32 %v502, %v629
    %v631 = vpop.f32.mrf.mxu0
    %632 = vmatprep.mubr.f32.mxu0 0.0
    %633 = vmatmul.mubr.f32.gmra.mxu0 %v480
    %v634 = vpop.f32.mrf.mxu0
    %v635 = vadd.f32 %v502, %v634
    %v636 = vpop.f32.mrf.mxu0
    %637 = vmatprep.mubr.f32.mxu0 0.0
    %638 = vmatmul.mubr.f32.gmra.mxu0 %v481
    %v639 = vpop.f32.mrf.mxu0
    %v640 = vadd.f32 %v502, %v639
    %v641 = vpop.f32.mrf.mxu0
    %642 = vmatprep.mubr.f32.mxu0 0.0
    %643 = vmatmul.mubr.f32.gmra.mxu0 %v482
    %v644 = vpop.f32.mrf.mxu0
    %v645 = vadd.f32 %v502, %v644
    %v646 = vpop.f32.mrf.mxu0
    %647 = vdwg.mxu0
    %v648 = vmax.f32 %v570, 0.0
    %v649 = vmax.f32 %v575, 0.0
    %v650 = vmax.f32 %v580, 0.0
    %v651 = vmax.f32 %v585, 0.0
    %v652 = vmax.f32 %v590, 0.0
    %v653 = vmax.f32 %v595, 0.0
    %v654 = vmax.f32 %v600, 0.0
    %v655 = vmax.f32 %v605, 0.0
    %v656 = vmax.f32 %v610, 0.0
    %v657 = vmax.f32 %v615, 0.0
    %v658 = vmax.f32 %v620, 0.0
    %v659 = vmax.f32 %v625, 0.0
    %v660 = vmax.f32 %v630, 0.0
    %v661 = vmax.f32 %v635, 0.0
    %v662 = vmax.f32 %v640, 0.0
    %v663 = vmax.f32 %v645, 0.0
    %v664 = vld [vmem:[%s4] sm:$0xff]
    %v665 = vld [vmem:[%s4 + $0x8] sm:$0xff]
    %v666 = vld [vmem:[%s4 + $0x10] sm:$0xff]
    %v667 = vld [vmem:[%s4 + $0x18] sm:$0xff]
    %v668 = vld [vmem:[%s4 + $0x20] sm:$0xff]
    %v669 = vld [vmem:[%s4 + $0x28] sm:$0xff]
    %v670 = vld [vmem:[%s4 + $0x30] sm:$0xff]
    %v671 = vld [vmem:[%s4 + $0x38] sm:$0xff]
    %v672 = vld [vmem:[%s1] sm:$0xff]
    %v673 = vld [vmem:[%s1 + $0x8] sm:$0xff]
    %v674 = vld [vmem:[%s1 + $0x10] sm:$0xff]
    %v675 = vld [vmem:[%s1 + $0x18] sm:$0xff]
    %v676 = vld [vmem:[%s1 + $0x20] sm:$0xff]
    %v677 = vld [vmem:[%s1 + $0x28] sm:$0xff]
    %v678 = vld [vmem:[%s1 + $0x30] sm:$0xff]
    %v679 = vld [vmem:[%s1 + $0x38] sm:$0xff]
    %v680 = vld [vmem:[%s1 + $0x40] sm:$0xff]
    %v681 = vld [vmem:[%s1 + $0x48] sm:$0xff]
    %v682 = vld [vmem:[%s1 + $0x50] sm:$0xff]
    %v683 = vld [vmem:[%s1 + $0x58] sm:$0xff]
    %v684 = vld [vmem:[%s1 + $0x60] sm:$0xff]
    %v685 = vld [vmem:[%s1 + $0x68] sm:$0xff]
    %v686 = vld [vmem:[%s1 + $0x70] sm:$0xff]
    %v687 = vld [vmem:[%s1 + $0x78] sm:$0xff]
    %689 = vset.pattern.permute.xlu0 0
    %690 = vperm.xlu0 %689, %v672
    %v691 = vpop.permute.xlu0 %690
    %694 = vset.pattern.permute.xlu0 0
    %695 = vperm.xlu0 %694, %v673
    %v696 = vpop.permute.xlu0 %695
    %699 = vset.pattern.permute.xlu0 0
    %700 = vperm.xlu0 %699, %v674
    %v701 = vpop.permute.xlu0 %700
    %704 = vset.pattern.permute.xlu0 0
    %705 = vperm.xlu0 %704, %v675
    %v706 = vpop.permute.xlu0 %705
    %709 = vset.pattern.permute.xlu0 0
    %710 = vperm.xlu0 %709, %v676
    %v711 = vpop.permute.xlu0 %710
    %714 = vset.pattern.permute.xlu0 0
    %715 = vperm.xlu0 %714, %v677
    %v716 = vpop.permute.xlu0 %715
    %719 = vset.pattern.permute.xlu0 0
    %720 = vperm.xlu0 %719, %v678
    %v721 = vpop.permute.xlu0 %720
    %724 = vset.pattern.permute.xlu0 0
    %725 = vperm.xlu0 %724, %v679
    %v726 = vpop.permute.xlu0 %725
    %729 = vset.pattern.permute.xlu0 0
    %730 = vperm.xlu0 %729, %v680
    %v731 = vpop.permute.xlu0 %730
    %734 = vset.pattern.permute.xlu0 0
    %735 = vperm.xlu0 %734, %v681
    %v736 = vpop.permute.xlu0 %735
    %739 = vset.pattern.permute.xlu0 0
    %740 = vperm.xlu0 %739, %v682
    %v741 = vpop.permute.xlu0 %740
    %744 = vset.pattern.permute.xlu0 0
    %745 = vperm.xlu0 %744, %v683
    %v746 = vpop.permute.xlu0 %745
    %749 = vset.pattern.permute.xlu0 0
    %750 = vperm.xlu0 %749, %v684
    %v751 = vpop.permute.xlu0 %750
    %754 = vset.pattern.permute.xlu0 0
    %755 = vperm.xlu0 %754, %v685
    %v756 = vpop.permute.xlu0 %755
    %759 = vset.pattern.permute.xlu0 0
    %760 = vperm.xlu0 %759, %v686
    %v761 = vpop.permute.xlu0 %760
    %764 = vset.pattern.permute.xlu0 0
    %765 = vperm.xlu0 %764, %v687
    %v766 = vpop.permute.xlu0 %765
    %v768 = vlaneseq
    %v769 = vshrl.u32 %v768, 7
    %v770 = vsub.s32 0, %v769
    %v771 = vrot.slane %v43, %v770
    %v772 = vmul.f32 %v691, %v771
    %v773 = vmul.f32 %v696, %v771
    %v774 = vmul.f32 %v701, %v771
    %v775 = vmul.f32 %v706, %v771
    %v776 = vmul.f32 %v711, %v771
    %v777 = vmul.f32 %v716, %v771
    %v778 = vmul.f32 %v721, %v771
    %v779 = vmul.f32 %v726, %v771
    %v780 = vmul.f32 %v731, %v771
    %v781 = vmul.f32 %v736, %v771
    %v782 = vmul.f32 %v741, %v771
    %v783 = vmul.f32 %v746, %v771
    %v784 = vmul.f32 %v751, %v771
    %v785 = vmul.f32 %v756, %v771
    %v786 = vmul.f32 %v761, %v771
    %v787 = vmul.f32 %v766, %v771
    %vm788 = vcmask 523264
    %v790 = vsel %vm788, %v648, 0
    %v793 = vsel %vm788, %v649, 0
    %v796 = vsel %vm788, %v650, 0
    %v799 = vsel %vm788, %v651, 0
    %v802 = vsel %vm788, %v652, 0
    %v805 = vsel %vm788, %v653, 0
    %v808 = vsel %vm788, %v654, 0
    %v811 = vsel %vm788, %v655, 0
    %v814 = vsel %vm788, %v656, 0
    %v817 = vsel %vm788, %v657, 0
    %v820 = vsel %vm788, %v658, 0
    %v823 = vsel %vm788, %v659, 0
    %v826 = vsel %vm788, %v660, 0
    %v829 = vsel %vm788, %v661, 0
    %v832 = vsel %vm788, %v662, 0
    %v835 = vsel %vm788, %v663, 0
    %837 = vmatprep.subr.mxu0 0.0
    %838 = vmatpush1.msra.mxu0 0.0
    %839 = vmatprep.subr.mxu0 0.0
    %840 = vmatpush1.msra.mxu0 0.0
    %841 = vmatprep.subr.mxu0 0.0
    %842 = vmatpush1.msra.mxu0 0.0
    %843 = vmatprep.subr.mxu0 0.0
    %844 = vmatpush1.msra.mxu0 0.0
    %845 = vmatprep.subr.mxu0 0.0
    %846 = vmatpush1.msra.mxu0 0.0
    %847 = vmatprep.subr.mxu0 0.0
    %848 = vmatpush1.msra.mxu0 0.0
    %849 = vmatprep.subr.mxu0 0.0
    %850 = vmatpush1.msra.mxu0 0.0
    %851 = vmatprep.subr.mxu0 0.0
    %852 = vmatpush1.msra.mxu0 0.0
    %853 = vmatprep.subr.mxu0 0.0
    %854 = vmatpush1.msra.mxu0 %v671
    %855 = vmatprep.subr.mxu0 0.0
    %856 = vmatpush1.msra.mxu0 %v670
    %857 = vmatprep.subr.mxu0 0.0
    %858 = vmatpush1.msra.mxu0 %v669
    %859 = vmatprep.subr.mxu0 0.0
    %860 = vmatpush1.msra.mxu0 %v668
    %861 = vmatprep.subr.mxu0 0.0
    %862 = vmatpush1.msra.mxu0 %v667
    %863 = vmatprep.subr.mxu0 0.0
    %864 = vmatpush1.msra.mxu0 %v666
    %865 = vmatprep.subr.mxu0 0.0
    %866 = vmatpush1.msra.mxu0 %v665
    %867 = vmatprep.subr.mxu0 0.0
    %868 = vmatpush1.msra.mxu0 %v664
    %869 = vmatprep.subr.mxu0 0.0
    %870 = vmatpush2.msra.mxu0 0.0
    %871 = vmatprep.subr.mxu0 0.0
    %872 = vmatpush2.msra.mxu0 0.0
    %873 = vmatprep.subr.mxu0 0.0
    %874 = vmatpush2.msra.mxu0 0.0
    %875 = vmatprep.subr.mxu0 0.0
    %876 = vmatpush2.msra.mxu0 0.0
    %877 = vmatprep.subr.mxu0 0.0
    %878 = vmatpush2.msra.mxu0 0.0
    %879 = vmatprep.subr.mxu0 0.0
    %880 = vmatpush2.msra.mxu0 0.0
    %881 = vmatprep.subr.mxu0 0.0
    %882 = vmatpush2.msra.mxu0 0.0
    %883 = vmatprep.subr.mxu0 0.0
    %884 = vmatpush2.msra.mxu0 0.0
    %885 = vmatprep.subr.mxu0 0.0
    %886 = vmatpush2.msra.mxu0 0.0
    %887 = vmatprep.subr.mxu0 0.0
    %888 = vmatpush2.msra.mxu0 0.0
    %889 = vmatprep.subr.mxu0 0.0
    %890 = vmatpush2.msra.mxu0 0.0
    %891 = vmatprep.subr.mxu0 0.0
    %892 = vmatpush2.msra.mxu0 0.0
    %893 = vmatprep.subr.mxu0 0.0
    %894 = vmatpush2.msra.mxu0 0.0
    %895 = vmatprep.subr.mxu0 0.0
    %896 = vmatpush2.msra.mxu0 0.0
    %897 = vmatprep.subr.mxu0 0.0
    %898 = vmatpush2.msra.mxu0 0.0
    %899 = vmatprep.subr.mxu0 0.0
    %900 = vmatpush2.msra.mxu0 0.0
    %901 = vmatprep.mubr.f32.mxu0 0.0
    %902 = vmatmul.mubr.f32.gmra.mxu0 %v790
    %v903 = vpop.f32.mrf.mxu0
    %v904 = vadd.f32 %v772, %v903
    %v905 = vpop.f32.mrf.mxu0
    %906 = vmatprep.mubr.f32.mxu0 0.0
    %907 = vmatmul.mubr.f32.gmra.mxu0 %v793
    %v908 = vpop.f32.mrf.mxu0
    %v909 = vadd.f32 %v773, %v908
    %v910 = vpop.f32.mrf.mxu0
    %911 = vmatprep.mubr.f32.mxu0 0.0
    %912 = vmatmul.mubr.f32.gmra.mxu0 %v796
    %v913 = vpop.f32.mrf.mxu0
    %v914 = vadd.f32 %v774, %v913
    %v915 = vpop.f32.mrf.mxu0
    %916 = vmatprep.mubr.f32.mxu0 0.0
    %917 = vmatmul.mubr.f32.gmra.mxu0 %v799
    %v918 = vpop.f32.mrf.mxu0
    %v919 = vadd.f32 %v775, %v918
    %v920 = vpop.f32.mrf.mxu0
    %921 = vmatprep.mubr.f32.mxu0 0.0
    %922 = vmatmul.mubr.f32.gmra.mxu0 %v802
    %v923 = vpop.f32.mrf.mxu0
    %v924 = vadd.f32 %v776, %v923
    %v925 = vpop.f32.mrf.mxu0
    %926 = vmatprep.mubr.f32.mxu0 0.0
    %927 = vmatmul.mubr.f32.gmra.mxu0 %v805
    %v928 = vpop.f32.mrf.mxu0
    %v929 = vadd.f32 %v777, %v928
    %v930 = vpop.f32.mrf.mxu0
    %931 = vmatprep.mubr.f32.mxu0 0.0
    %932 = vmatmul.mubr.f32.gmra.mxu0 %v808
    %v933 = vpop.f32.mrf.mxu0
    %v934 = vadd.f32 %v778, %v933
    %v935 = vpop.f32.mrf.mxu0
    %936 = vmatprep.mubr.f32.mxu0 0.0
    %937 = vmatmul.mubr.f32.gmra.mxu0 %v811
    %v938 = vpop.f32.mrf.mxu0
    %v939 = vadd.f32 %v779, %v938
    %v940 = vpop.f32.mrf.mxu0
    %941 = vmatprep.mubr.f32.mxu0 0.0
    %942 = vmatmul.mubr.f32.gmra.mxu0 %v814
    %v943 = vpop.f32.mrf.mxu0
    %v944 = vadd.f32 %v780, %v943
    %v945 = vpop.f32.mrf.mxu0
    %946 = vmatprep.mubr.f32.mxu0 0.0
    %947 = vmatmul.mubr.f32.gmra.mxu0 %v817
    %v948 = vpop.f32.mrf.mxu0
    %v949 = vadd.f32 %v781, %v948
    %v950 = vpop.f32.mrf.mxu0
    %951 = vmatprep.mubr.f32.mxu0 0.0
    %952 = vmatmul.mubr.f32.gmra.mxu0 %v820
    %v953 = vpop.f32.mrf.mxu0
    %v954 = vadd.f32 %v782, %v953
    %v955 = vpop.f32.mrf.mxu0
    %956 = vmatprep.mubr.f32.mxu0 0.0
    %957 = vmatmul.mubr.f32.gmra.mxu0 %v823
    %v958 = vpop.f32.mrf.mxu0
    %v959 = vadd.f32 %v783, %v958
    %v960 = vpop.f32.mrf.mxu0
    %961 = vmatprep.mubr.f32.mxu0 0.0
    %962 = vmatmul.mubr.f32.gmra.mxu0 %v826
    %v963 = vpop.f32.mrf.mxu0
    %v964 = vadd.f32 %v784, %v963
    %v965 = vpop.f32.mrf.mxu0
    %966 = vmatprep.mubr.f32.mxu0 0.0
    %967 = vmatmul.mubr.f32.gmra.mxu0 %v829
    %v968 = vpop.f32.mrf.mxu0
    %v969 = vadd.f32 %v785, %v968
    %v970 = vpop.f32.mrf.mxu0
    %971 = vmatprep.mubr.f32.mxu0 0.0
    %972 = vmatmul.mubr.f32.gmra.mxu0 %v832
    %v973 = vpop.f32.mrf.mxu0
    %v974 = vadd.f32 %v786, %v973
    %v975 = vpop.f32.mrf.mxu0
    %976 = vmatprep.mubr.f32.mxu0 0.0
    %977 = vmatmul.mubr.f32.gmra.mxu0 %v835
    %v978 = vpop.f32.mrf.mxu0
    %v979 = vadd.f32 %v787, %v978
    %v980 = vpop.f32.mrf.mxu0
    %981 = vdwg.mxu0
    %v982 = vlaneseq
    %v983 = vshrl.u32 %v982, 7
    %v984 = vsub.s32 0, %v983
    %v985 = vrot.slane %v42, %v984
    %v986 = vadd.f32 %v904, %v985
    %v987 = vadd.f32 %v909, %v985
    %v988 = vadd.f32 %v914, %v985
    %v989 = vadd.f32 %v919, %v985
    %v990 = vadd.f32 %v924, %v985
    %v991 = vadd.f32 %v929, %v985
    %v992 = vadd.f32 %v934, %v985
    %v993 = vadd.f32 %v939, %v985
    %v994 = vadd.f32 %v944, %v985
    %v995 = vadd.f32 %v949, %v985
    %v996 = vadd.f32 %v954, %v985
    %v997 = vadd.f32 %v959, %v985
    %v998 = vadd.f32 %v964, %v985
    %v999 = vadd.f32 %v969, %v985
    %v1000 = vadd.f32 %v974, %v985
    %v1001 = vadd.f32 %v979, %v985
    %v1002 = vmax.f32 %v986, 0.0
    %v1003 = vmax.f32 %v987, 0.0
    %v1004 = vmax.f32 %v988, 0.0
    %v1005 = vmax.f32 %v989, 0.0
    %v1006 = vmax.f32 %v990, 0.0
    %v1007 = vmax.f32 %v991, 0.0
    %v1008 = vmax.f32 %v992, 0.0
    %v1009 = vmax.f32 %v993, 0.0
    %v1010 = vmax.f32 %v994, 0.0
    %v1011 = vmax.f32 %v995, 0.0
    %v1012 = vmax.f32 %v996, 0.0
    %v1013 = vmax.f32 %v997, 0.0
    %v1014 = vmax.f32 %v998, 0.0
    %v1015 = vmax.f32 %v999, 0.0
    %v1016 = vmax.f32 %v1000, 0.0
    %v1017 = vmax.f32 %v1001, 0.0
    %v1018 = vld [vmem:[%s5] sm:$0xff]
    %v1019 = vld [vmem:[%s5 + $0x8] sm:$0xff]
    %v1020 = vld [vmem:[%s5 + $0x10] sm:$0xff]
    %v1021 = vld [vmem:[%s5 + $0x18] sm:$0xff]
    %v1022 = vlaneseq
    %v1023 = vshrl.u32 %v1022, 7
    %v1024 = vsub.s32 0, %v1023
    %v1025 = vrot.slane %v44, %v1024
    %vm1026 = vcmask 261120
    %v1028 = vsel %vm1026, %v1002, 0
    %v1031 = vsel %vm1026, %v1003, 0
    %v1034 = vsel %vm1026, %v1004, 0
    %v1037 = vsel %vm1026, %v1005, 0
    %v1040 = vsel %vm1026, %v1006, 0
    %v1043 = vsel %vm1026, %v1007, 0
    %v1046 = vsel %vm1026, %v1008, 0
    %v1049 = vsel %vm1026, %v1009, 0
    %v1052 = vsel %vm1026, %v1010, 0
    %v1055 = vsel %vm1026, %v1011, 0
    %v1058 = vsel %vm1026, %v1012, 0
    %v1061 = vsel %vm1026, %v1013, 0
    %v1064 = vsel %vm1026, %v1014, 0
    %v1067 = vsel %vm1026, %v1015, 0
    %v1070 = vsel %vm1026, %v1016, 0
    %v1073 = vsel %vm1026, %v1017, 0
    %1075 = vmatprep.subr.mxu0 0.0
    %1076 = vmatpush1.msra.mxu0 0.0
    %1077 = vmatprep.subr.mxu0 0.0
    %1078 = vmatpush1.msra.mxu0 0.0
    %1079 = vmatprep.subr.mxu0 0.0
    %1080 = vmatpush1.msra.mxu0 0.0
    %1081 = vmatprep.subr.mxu0 0.0
    %1082 = vmatpush1.msra.mxu0 0.0
    %1083 = vmatprep.subr.mxu0 0.0
    %1084 = vmatpush1.msra.mxu0 0.0
    %1085 = vmatprep.subr.mxu0 0.0
    %1086 = vmatpush1.msra.mxu0 0.0
    %1087 = vmatprep.subr.mxu0 0.0
    %1088 = vmatpush1.msra.mxu0 0.0
    %1089 = vmatprep.subr.mxu0 0.0
    %1090 = vmatpush1.msra.mxu0 0.0
    %1091 = vmatprep.subr.mxu0 0.0
    %1092 = vmatpush1.msra.mxu0 0.0
    %1093 = vmatprep.subr.mxu0 0.0
    %1094 = vmatpush1.msra.mxu0 0.0
    %1095 = vmatprep.subr.mxu0 0.0
    %1096 = vmatpush1.msra.mxu0 0.0
    %1097 = vmatprep.subr.mxu0 0.0
    %1098 = vmatpush1.msra.mxu0 0.0
    %1099 = vmatprep.subr.mxu0 0.0
    %1100 = vmatpush1.msra.mxu0 %v1021
    %1101 = vmatprep.subr.mxu0 0.0
    %1102 = vmatpush1.msra.mxu0 %v1020
    %1103 = vmatprep.subr.mxu0 0.0
    %1104 = vmatpush1.msra.mxu0 %v1019
    %1105 = vmatprep.subr.mxu0 0.0
    %1106 = vmatpush1.msra.mxu0 %v1018
    %1107 = vmatprep.subr.mxu0 0.0
    %1108 = vmatpush2.msra.mxu0 0.0
    %1109 = vmatprep.subr.mxu0 0.0
    %1110 = vmatpush2.msra.mxu0 0.0
    %1111 = vmatprep.subr.mxu0 0.0
    %1112 = vmatpush2.msra.mxu0 0.0
    %1113 = vmatprep.subr.mxu0 0.0
    %1114 = vmatpush2.msra.mxu0 0.0
    %1115 = vmatprep.subr.mxu0 0.0
    %1116 = vmatpush2.msra.mxu0 0.0
    %1117 = vmatprep.subr.mxu0 0.0
    %1118 = vmatpush2.msra.mxu0 0.0
    %1119 = vmatprep.subr.mxu0 0.0
    %1120 = vmatpush2.msra.mxu0 0.0
    %1121 = vmatprep.subr.mxu0 0.0
    %1122 = vmatpush2.msra.mxu0 0.0
    %1123 = vmatprep.subr.mxu0 0.0
    %1124 = vmatpush2.msra.mxu0 0.0
    %1125 = vmatprep.subr.mxu0 0.0
    %1126 = vmatpush2.msra.mxu0 0.0
    %1127 = vmatprep.subr.mxu0 0.0
    %1128 = vmatpush2.msra.mxu0 0.0
    %1129 = vmatprep.subr.mxu0 0.0
    %1130 = vmatpush2.msra.mxu0 0.0
    %1131 = vmatprep.subr.mxu0 0.0
    %1132 = vmatpush2.msra.mxu0 0.0
    %1133 = vmatprep.subr.mxu0 0.0
    %1134 = vmatpush2.msra.mxu0 0.0
    %1135 = vmatprep.subr.mxu0 0.0
    %1136 = vmatpush2.msra.mxu0 0.0
    %1137 = vmatprep.subr.mxu0 0.0
    %1138 = vmatpush2.msra.mxu0 0.0
    %1139 = vmatprep.mubr.f32.mxu0 0.0
    %1140 = vmatmul.mubr.f32.gmra.mxu0 %v1028
    %v1141 = vpop.f32.mrf.mxu0
    %v1142 = vadd.f32 %v1025, %v1141
    %v1143 = vpop.f32.mrf.mxu0
    %1144 = vmatprep.mubr.f32.mxu0 0.0
    %1145 = vmatmul.mubr.f32.gmra.mxu0 %v1031
    %v1146 = vpop.f32.mrf.mxu0
    %v1147 = vadd.f32 %v1025, %v1146
    %v1148 = vpop.f32.mrf.mxu0
    %1149 = vmatprep.mubr.f32.mxu0 0.0
    %1150 = vmatmul.mubr.f32.gmra.mxu0 %v1034
    %v1151 = vpop.f32.mrf.mxu0
    %v1152 = vadd.f32 %v1025, %v1151
    %v1153 = vpop.f32.mrf.mxu0
    %1154 = vmatprep.mubr.f32.mxu0 0.0
    %1155 = vmatmul.mubr.f32.gmra.mxu0 %v1037
    %v1156 = vpop.f32.mrf.mxu0
    %v1157 = vadd.f32 %v1025, %v1156
    %v1158 = vpop.f32.mrf.mxu0
    %1159 = vmatprep.mubr.f32.mxu0 0.0
    %1160 = vmatmul.mubr.f32.gmra.mxu0 %v1040
    %v1161 = vpop.f32.mrf.mxu0
    %v1162 = vadd.f32 %v1025, %v1161
    %v1163 = vpop.f32.mrf.mxu0
    %1164 = vmatprep.mubr.f32.mxu0 0.0
    %1165 = vmatmul.mubr.f32.gmra.mxu0 %v1043
    %v1166 = vpop.f32.mrf.mxu0
    %v1167 = vadd.f32 %v1025, %v1166
    %v1168 = vpop.f32.mrf.mxu0
    %1169 = vmatprep.mubr.f32.mxu0 0.0
    %1170 = vmatmul.mubr.f32.gmra.mxu0 %v1046
    %v1171 = vpop.f32.mrf.mxu0
    %v1172 = vadd.f32 %v1025, %v1171
    %v1173 = vpop.f32.mrf.mxu0
    %1174 = vmatprep.mubr.f32.mxu0 0.0
    %1175 = vmatmul.mubr.f32.gmra.mxu0 %v1049
    %v1176 = vpop.f32.mrf.mxu0
    %v1177 = vadd.f32 %v1025, %v1176
    %v1178 = vpop.f32.mrf.mxu0
    %1179 = vmatprep.mubr.f32.mxu0 0.0
    %1180 = vmatmul.mubr.f32.gmra.mxu0 %v1052
    %v1181 = vpop.f32.mrf.mxu0
    %v1182 = vadd.f32 %v1025, %v1181
    %v1183 = vpop.f32.mrf.mxu0
    %1184 = vmatprep.mubr.f32.mxu0 0.0
    %1185 = vmatmul.mubr.f32.gmra.mxu0 %v1055
    %v1186 = vpop.f32.mrf.mxu0
    %v1187 = vadd.f32 %v1025, %v1186
    %v1188 = vpop.f32.mrf.mxu0
    %1189 = vmatprep.mubr.f32.mxu0 0.0
    %1190 = vmatmul.mubr.f32.gmra.mxu0 %v1058
    %v1191 = vpop.f32.mrf.mxu0
    %v1192 = vadd.f32 %v1025, %v1191
    %v1193 = vpop.f32.mrf.mxu0
    %1194 = vmatprep.mubr.f32.mxu0 0.0
    %1195 = vmatmul.mubr.f32.gmra.mxu0 %v1061
    %v1196 = vpop.f32.mrf.mxu0
    %v1197 = vadd.f32 %v1025, %v1196
    %v1198 = vpop.f32.mrf.mxu0
    %1199 = vmatprep.mubr.f32.mxu0 0.0
    %1200 = vmatmul.mubr.f32.gmra.mxu0 %v1064
    %v1201 = vpop.f32.mrf.mxu0
    %v1202 = vadd.f32 %v1025, %v1201
    %v1203 = vpop.f32.mrf.mxu0
    %1204 = vmatprep.mubr.f32.mxu0 0.0
    %1205 = vmatmul.mubr.f32.gmra.mxu0 %v1067
    %v1206 = vpop.f32.mrf.mxu0
    %v1207 = vadd.f32 %v1025, %v1206
    %v1208 = vpop.f32.mrf.mxu0
    %1209 = vmatprep.mubr.f32.mxu0 0.0
    %1210 = vmatmul.mubr.f32.gmra.mxu0 %v1070
    %v1211 = vpop.f32.mrf.mxu0
    %v1212 = vadd.f32 %v1025, %v1211
    %v1213 = vpop.f32.mrf.mxu0
    %1214 = vmatprep.mubr.f32.mxu0 0.0
    %1215 = vmatmul.mubr.f32.gmra.mxu0 %v1073
    %v1216 = vpop.f32.mrf.mxu0
    %v1217 = vadd.f32 %v1025, %v1216
    %v1218 = vpop.f32.mrf.mxu0
    %1219 = vdwg.mxu0
    %v1220 = vmax.f32 %v1142, 0.0
    %v1221 = vmax.f32 %v1147, 0.0
    %v1222 = vmax.f32 %v1152, 0.0
    %v1223 = vmax.f32 %v1157, 0.0
    %v1224 = vmax.f32 %v1162, 0.0
    %v1225 = vmax.f32 %v1167, 0.0
    %v1226 = vmax.f32 %v1172, 0.0
    %v1227 = vmax.f32 %v1177, 0.0
    %v1228 = vmax.f32 %v1182, 0.0
    %v1229 = vmax.f32 %v1187, 0.0
    %v1230 = vmax.f32 %v1192, 0.0
    %v1231 = vmax.f32 %v1197, 0.0
    %v1232 = vmax.f32 %v1202, 0.0
    %v1233 = vmax.f32 %v1207, 0.0
    %v1234 = vmax.f32 %v1212, 0.0
    %v1235 = vmax.f32 %v1217, 0.0
    %v1236 = vlaneseq
    %v1237 = vshrl.u32 %v1236, 7
    %v1238 = vsub.s32 0, %v1237
    %v1239 = vrot.slane %v45, %v1238
    %v1240 = vmul.f32 %v1220, %v1239
    %v1241 = vmul.f32 %v1221, %v1239
    %v1242 = vmul.f32 %v1222, %v1239
    %v1243 = vmul.f32 %v1223, %v1239
    %v1244 = vmul.f32 %v1224, %v1239
    %v1245 = vmul.f32 %v1225, %v1239
    %v1246 = vmul.f32 %v1226, %v1239
    %v1247 = vmul.f32 %v1227, %v1239
    %v1248 = vmul.f32 %v1228, %v1239
    %v1249 = vmul.f32 %v1229, %v1239
    %v1250 = vmul.f32 %v1230, %v1239
    %v1251 = vmul.f32 %v1231, %v1239
    %v1252 = vmul.f32 %v1232, %v1239
    %v1253 = vmul.f32 %v1233, %v1239
    %v1254 = vmul.f32 %v1234, %v1239
    %v1255 = vmul.f32 %v1235, %v1239
    %vm1256 = vcmask 64512
    %v1257 = vsel %vm1256, %v1240, 0.0
    %1258 = vadd.xlane.f32.xlu0 %v1257
    %v1259 = vpop.xlane.xlu0 %1258
    %v1260 = vsel %vm1256, %v1241, 0.0
    %1261 = vadd.xlane.f32.xlu0 %v1260
    %v1262 = vpop.xlane.xlu0 %1261
    %v1263 = vsel %vm1256, %v1242, 0.0
    %1264 = vadd.xlane.f32.xlu0 %v1263
    %v1265 = vpop.xlane.xlu0 %1264
    %v1266 = vsel %vm1256, %v1243, 0.0
    %1267 = vadd.xlane.f32.xlu0 %v1266
    %v1268 = vpop.xlane.xlu0 %1267
    %v1269 = vsel %vm1256, %v1244, 0.0
    %1270 = vadd.xlane.f32.xlu0 %v1269
    %v1271 = vpop.xlane.xlu0 %1270
    %v1272 = vsel %vm1256, %v1245, 0.0
    %1273 = vadd.xlane.f32.xlu0 %v1272
    %v1274 = vpop.xlane.xlu0 %1273
    %v1275 = vsel %vm1256, %v1246, 0.0
    %1276 = vadd.xlane.f32.xlu0 %v1275
    %v1277 = vpop.xlane.xlu0 %1276
    %v1278 = vsel %vm1256, %v1247, 0.0
    %1279 = vadd.xlane.f32.xlu0 %v1278
    %v1280 = vpop.xlane.xlu0 %1279
    %v1281 = vsel %vm1256, %v1248, 0.0
    %1282 = vadd.xlane.f32.xlu0 %v1281
    %v1283 = vpop.xlane.xlu0 %1282
    %v1284 = vsel %vm1256, %v1249, 0.0
    %1285 = vadd.xlane.f32.xlu0 %v1284
    %v1286 = vpop.xlane.xlu0 %1285
    %v1287 = vsel %vm1256, %v1250, 0.0
    %1288 = vadd.xlane.f32.xlu0 %v1287
    %v1289 = vpop.xlane.xlu0 %1288
    %v1290 = vsel %vm1256, %v1251, 0.0
    %1291 = vadd.xlane.f32.xlu0 %v1290
    %v1292 = vpop.xlane.xlu0 %1291
    %v1293 = vsel %vm1256, %v1252, 0.0
    %1294 = vadd.xlane.f32.xlu0 %v1293
    %v1295 = vpop.xlane.xlu0 %1294
    %v1296 = vsel %vm1256, %v1253, 0.0
    %1297 = vadd.xlane.f32.xlu0 %v1296
    %v1298 = vpop.xlane.xlu0 %1297
    %v1299 = vsel %vm1256, %v1254, 0.0
    %1300 = vadd.xlane.f32.xlu0 %v1299
    %v1301 = vpop.xlane.xlu0 %1300
    %v1302 = vsel %vm1256, %v1255, 0.0
    %1303 = vadd.xlane.f32.xlu0 %v1302
    %v1304 = vpop.xlane.xlu0 %1303
    %v1305 = vlaneseq
    %v1306 = vshrl.u32 %v1305, 7
    %v1307 = vsub.s32 0, %v1306
    %v1308 = vrot.slane %v46, %v1307
    %v1309 = vadd.f32 %v1259, %v1308
    %v1310 = vadd.f32 %v1262, %v1308
    %v1311 = vadd.f32 %v1265, %v1308
    %v1312 = vadd.f32 %v1268, %v1308
    %v1313 = vadd.f32 %v1271, %v1308
    %v1314 = vadd.f32 %v1274, %v1308
    %v1315 = vadd.f32 %v1277, %v1308
    %v1316 = vadd.f32 %v1280, %v1308
    %v1317 = vadd.f32 %v1283, %v1308
    %v1318 = vadd.f32 %v1286, %v1308
    %v1319 = vadd.f32 %v1289, %v1308
    %v1320 = vadd.f32 %v1292, %v1308
    %v1321 = vadd.f32 %v1295, %v1308
    %v1322 = vadd.f32 %v1298, %v1308
    %v1323 = vadd.f32 %v1301, %v1308
    %v1324 = vadd.f32 %v1304, %v1308
    %1341 = vrot.lane.b32.xlu0 %v1309, 125
    %v1342 = vpop.permute.xlu0 %1341
    %1343 = vrot.lane.b32.xlu0 %v1310, 125
    %v1344 = vpop.permute.xlu0 %1343
    %1345 = vrot.lane.b32.xlu0 %v1311, 125
    %v1346 = vpop.permute.xlu0 %1345
    %1347 = vrot.lane.b32.xlu0 %v1312, 125
    %v1348 = vpop.permute.xlu0 %1347
    %1349 = vrot.lane.b32.xlu0 %v1313, 125
    %v1350 = vpop.permute.xlu0 %1349
    %1351 = vrot.lane.b32.xlu0 %v1314, 125
    %v1352 = vpop.permute.xlu0 %1351
    %1353 = vrot.lane.b32.xlu0 %v1315, 125
    %v1354 = vpop.permute.xlu0 %1353
    %1355 = vrot.lane.b32.xlu0 %v1316, 125
    %v1356 = vpop.permute.xlu0 %1355
    %1357 = vrot.lane.b32.xlu0 %v1317, 125
    %v1358 = vpop.permute.xlu0 %1357
    %1359 = vrot.lane.b32.xlu0 %v1318, 125
    %v1360 = vpop.permute.xlu0 %1359
    %1361 = vrot.lane.b32.xlu0 %v1319, 125
    %v1362 = vpop.permute.xlu0 %1361
    %1363 = vrot.lane.b32.xlu0 %v1320, 125
    %v1364 = vpop.permute.xlu0 %1363
    %1365 = vrot.lane.b32.xlu0 %v1321, 125
    %v1366 = vpop.permute.xlu0 %1365
    %1367 = vrot.lane.b32.xlu0 %v1322, 125
    %v1368 = vpop.permute.xlu0 %1367
    %1369 = vrot.lane.b32.xlu0 %v1323, 125
    %v1370 = vpop.permute.xlu0 %1369
    %1371 = vrot.lane.b32.xlu0 %v1324, 125
    %v1372 = vpop.permute.xlu0 %1371
    %vm1389 = vcmask 7168
    %1390 = vst.msk [vmem:[%s7] sm:$0xff] %vm1389, %v1342
    %1391 = vst.msk [vmem:[%s7 + $0x8] sm:$0xff] %vm1389, %v1344
    %1392 = vst.msk [vmem:[%s7 + $0x10] sm:$0xff] %vm1389, %v1346
    %1393 = vst.msk [vmem:[%s7 + $0x18] sm:$0xff] %vm1389, %v1348
    %1394 = vst.msk [vmem:[%s7 + $0x20] sm:$0xff] %vm1389, %v1350
    %1395 = vst.msk [vmem:[%s7 + $0x28] sm:$0xff] %vm1389, %v1352
    %1396 = vst.msk [vmem:[%s7 + $0x30] sm:$0xff] %vm1389, %v1354
    %1397 = vst.msk [vmem:[%s7 + $0x38] sm:$0xff] %vm1389, %v1356
    %1398 = vst.msk [vmem:[%s7 + $0x40] sm:$0xff] %vm1389, %v1358
    %1399 = vst.msk [vmem:[%s7 + $0x48] sm:$0xff] %vm1389, %v1360
    %1400 = vst.msk [vmem:[%s7 + $0x50] sm:$0xff] %vm1389, %v1362
    %1401 = vst.msk [vmem:[%s7 + $0x58] sm:$0xff] %vm1389, %v1364
    %1402 = vst.msk [vmem:[%s7 + $0x60] sm:$0xff] %vm1389, %v1366
    %1403 = vst.msk [vmem:[%s7 + $0x68] sm:$0xff] %vm1389, %v1368
    %1404 = vst.msk [vmem:[%s7 + $0x70] sm:$0xff] %vm1389, %v1370
    %1405 = vst.msk [vmem:[%s7 + $0x78] sm:$0xff] %vm1389, %v1372
    // Predicated region
    $region34: #{tpu_custom_call.1} parent=1 // pred_check
      _
    $region35: #{tpu_custom_call.1} parent=1 // pred_check_branch
      %1407 = sbr.rel (0) target = $region37
    $region36: #{tpu_custom_call.1} parent=1 // pred_region
      _
    $region37: #{tpu_custom_call.1} parent=1 // pred_fallthru
      _
    // Predicated region
    $region38: #{tpu_custom_call.1} parent=1 // pred_check
      _
    $region39: #{tpu_custom_call.1} parent=1 // pred_check_branch
      %1409 = sbr.rel (0) target = $region41
    $region40: #{tpu_custom_call.1} parent=1 // pred_region
      _
    $region41: #{tpu_custom_call.1} parent=1 // pred_fallthru
      _
    %1410 = vsyncpa [#allocation3], 1

</llo_original>
